<compile_context>
chip_gen: v5e
topology: v5e:2x2
jax: 0.10.0
libtpu: 0.0.40
codegen_flags: <defaults>
</compile_context>

<pallas_src>
import jax
import jax.numpy as jnp
from jax.experimental import pallas as pl
from jax.experimental.pallas import tpu as pltpu

# ---- small synthetic stand-in dims for BioLinkBERT-base ----
B, S, H = 2, 8, 64            # batch, seq, hidden (real model: H=768)
NUM_HEADS, HEAD_DIM = 2, 32
FF = 128                      # feed-forward dim (real model: 3072)
VOCAB = 100
FEATURE_BASE_DIM = 32         # `feature_base_dim` of the module
EPS = 1e-12
BB = 2 * B                    # finding + impression stacked along batch
M = BB * S                    # total rows through the encoder body (32)

KERNEL_WEIGHT_KEYS = [
    "lne_g", "lne_b",
    "wqkv", "bqkv", "wo", "bo",
    "ln1_g", "ln1_b",
    "w1", "b1", "w2", "b2",
    "ln2_g", "ln2_b",
    "w_pool", "b_pool",
    "w_fc_a", "w_fc_b", "b_fc",
]


def _layernorm(x, g, b):
    mu = jnp.mean(x, axis=-1, keepdims=True)
    var = jnp.mean((x - mu) ** 2, axis=-1, keepdims=True)
    return (x - mu) * jax.lax.rsqrt(var + EPS) * g + b


# --------------------------- fused Pallas kernel ------------------------------

def fused_encoder_kernel(x_ref, bias_ref,
                         lne_g, lne_b,
                         wqkv, bqkv, wo, bo,
                         ln1_g, ln1_b,
                         w1, b1, w2, b2,
                         ln2_g, ln2_b,
                         wp, bp,
                         wfc_a, wfc_b, bfc,
                         out_ref):
    # ---- embedding LayerNorm (f32 VPU math) on flat (M, H) rows ----
    x = _layernorm(x_ref[...].astype(jnp.float32), lne_g[...], lne_b[...])  # (M, H)
    xb = x.astype(jnp.bfloat16)

    # ---- fused QKV projection: one bf16 MXU push, N = 3H ----
    qkv = jnp.dot(xb, wqkv[...], preferred_element_type=jnp.float32) + bqkv[...]

    # Precomputed additive mask: block-diagonal (per-sequence) + key padding.
    bias = bias_ref[...]                                            # (M, M) f32

    scale = 1.0 / (HEAD_DIM ** 0.5)
    ctx_heads = []
    for h in range(NUM_HEADS):                                      # 2 heads, static
        lo = h * HEAD_DIM
        q_h = qkv[:, 0 * H + lo:0 * H + lo + HEAD_DIM].astype(jnp.bfloat16)
        k_h = qkv[:, 1 * H + lo:1 * H + lo + HEAD_DIM].astype(jnp.bfloat16)
        v_h = qkv[:, 2 * H + lo:2 * H + lo + HEAD_DIM].astype(jnp.bfloat16)

        # block-diagonal scores: one (M, HD) x (M, HD)^T MXU matmul
        s = jax.lax.dot_general(q_h, k_h, (((1,), (1,)), ((), ())),
                                preferred_element_type=jnp.float32)  # (M, M)
        s = s * scale + bias
        s = s - jnp.max(s, axis=-1, keepdims=True)
        p = jnp.exp(s)
        p = p * pl.reciprocal(jnp.sum(p, axis=-1, keepdims=True), approx=True)
        ctx_heads.append(jnp.dot(p.astype(jnp.bfloat16), v_h,
                                 preferred_element_type=jnp.float32))  # (M, HD)

    # lane-concat the per-head contexts and do ONE output projection
    ctx = jnp.concatenate(ctx_heads, axis=-1).astype(jnp.bfloat16)  # (M, H)
    attn = jnp.dot(ctx, wo[...], preferred_element_type=jnp.float32) + bo[...]

    h1 = _layernorm(x + attn, ln1_g[...], ln1_b[...])               # (M, H)

    # ---- feed-forward ----
    ff = jnp.dot(h1.astype(jnp.bfloat16), w1[...],
                 preferred_element_type=jnp.float32) + b1[...]
    ff = jax.nn.gelu(ff)  # TODO(synk): HF BERT uses exact erf gelu; tanh approx used here.
    ff = jnp.dot(ff.astype(jnp.bfloat16), w2[...],
                 preferred_element_type=jnp.float32) + b2[...]
    hidden = _layernorm(h1 + ff, ln2_g[...], ln2_b[...])            # (M, H)

    # ---- pooler on the [CLS] rows of all 2B sequences in one dot ----
    cls = hidden.reshape(BB, S, H)[:, 0, :]                         # (BB, H)
    pooled = jnp.tanh(jnp.dot(cls.astype(jnp.bfloat16), wp[...],
                              preferred_element_type=jnp.float32) + bp[...])

    # ---- fc (Linear(2H, feature_base_dim) + LeakyReLU(0.2)); split-weight form
    #      (wfc_a = rows 0:H of weight.T, wfc_b = rows H:2H) ----
    p1 = pooled[0:B, :].astype(jnp.bfloat16)        # finding pooler_output
    p2 = pooled[B:2 * B, :].astype(jnp.bfloat16)    # impression pooler_output
    y = (jnp.dot(p1, wfc_a[...], preferred_element_type=jnp.float32)
         + jnp.dot(p2, wfc_b[...], preferred_element_type=jnp.float32)
         + bfc[...])
    out_ref[...] = jnp.where(y > 0, y, 0.2 * y).astype(out_ref.dtype)


# ----------------------------- wrapper ----------------------------------------

def _full_spec(a):
    n = a.ndim
    return pl.BlockSpec(a.shape, lambda i, _n=n: (0,) * _n)


def encoder_forward(finding_ids, impression_ids, finding_mask, impression_mask, params):
    # Stack both sequences so one pallas_call handles everything.
    ids = jnp.concatenate([finding_ids, impression_ids], axis=0)        # (2B, S)
    mask = jnp.concatenate([finding_mask, impression_mask], axis=0)     # (2B, S)

    # Embedding gather + position/type embeddings stay in plain JAX (glue).
    emb = (params["word_emb"][ids]
           + params["pos_emb"][None, :, :]
           + params["type_emb"][None, :, :]).astype(jnp.float32)        # (2B, S, H)
    emb = emb.reshape(M, H)                                             # (M, H)
    # TODO(synk): real BioLinkBERT-base has 12 pretrained layers; one synthetic layer here.

    # Block-diagonal additive attention mask, built once in the wrapper:
    #   bias[i, j] = 0 if (i, j) in the same sequence AND key j is unpadded, else -1e9.
    seq_id = jnp.arange(M, dtype=jnp.int32) // S                        # (M,)
    same_seq = seq_id[:, None] == seq_id[None, :]                       # (M, M)
    key_valid = (mask.reshape(M) > 0.5)[None, :]                        # (1, M)
    attn_bias = jnp.where(same_seq & key_valid, 0.0, -1e9).astype(jnp.float32)

    weights = tuple(params[k] for k in KERNEL_WEIGHT_KEYS)
    args = (emb, attn_bias) + weights

    cost = pl.CostEstimate(flops=2_400_000, transcendentals=6_000,
                           bytes_accessed=140_000)

    return pl.pallas_call(
        fused_encoder_kernel,
        grid=(1,),
        in_specs=[_full_spec(a) for a in args],
        out_specs=pl.BlockSpec((B, FEATURE_BASE_DIM), lambda i: (0, 0)),
        out_shape=jax.ShapeDtypeStruct((B, FEATURE_BASE_DIM), jnp.float32),
        compiler_params=pltpu.CompilerParams(
            dimension_semantics=("arbitrary",)),
        cost_estimate=cost,
    )(*args)


# --------------------------- parameter init ----------------------------------

def init_params(key):
    ks = jax.random.split(key, 16)

    def norm(k, shape, scale=0.02, dtype=jnp.bfloat16):
        return (scale * jax.random.normal(k, shape)).astype(dtype)

    p = {
        # embeddings stay f32 (gathered outside the kernel)
        "word_emb": norm(ks[0], (VOCAB, H), dtype=jnp.float32),
        "pos_emb": norm(ks[1], (S, H), dtype=jnp.float32),
        "type_emb": norm(ks[2], (1, H), dtype=jnp.float32),
        # layernorm params f32
        "lne_g": jnp.ones((1, H), jnp.float32), "lne_b": jnp.zeros((1, H), jnp.float32),
        "ln1_g": jnp.ones((1, H), jnp.float32), "ln1_b": jnp.zeros((1, H), jnp.float32),
        "ln2_g": jnp.ones((1, H), jnp.float32), "ln2_b": jnp.zeros((1, H), jnp.float32),
        # fused QKV (bf16 matmul operands), biases f32
        "wqkv": norm(ks[3], (H, 3 * H)), "bqkv": jnp.zeros((1, 3 * H), jnp.float32),
        "wo": norm(ks[4], (H, H)), "bo": jnp.zeros((1, H), jnp.float32),
        # feed-forward
        "w1": norm(ks[5], (H, FF)), "b1": jnp.zeros((1, FF), jnp.float32),
        "w2": norm(ks[6], (FF, H)), "b2": jnp.zeros((1, H), jnp.float32),
        # pooler (Linear(H,H) + tanh)
        "w_pool": norm(ks[7], (H, H)), "b_pool": jnp.zeros((1, H), jnp.float32),
        # fc (Linear(2H, feature_base_dim)) stored as two (H, F) halves of weight.T
        "w_fc_a": norm(ks[8], (H, FEATURE_BASE_DIM)),
        "w_fc_b": norm(ks[9], (H, FEATURE_BASE_DIM)),
        "b_fc": jnp.zeros((1, FEATURE_BASE_DIM), jnp.float32),
    }
    return p


if __name__ == "__main__":
    key = jax.random.PRNGKey(0)
    pkey, dkey = jax.random.split(key)
    params = init_params(pkey)

    k1, k2 = jax.random.split(dkey)
    finding_input_ids = jax.random.randint(k1, (B, S), 0, VOCAB, dtype=jnp.int32)
    impression_input_ids = jax.random.randint(k2, (B, S), 0, VOCAB, dtype=jnp.int32)
    finding_attention_mask = jnp.array([[1] * S, [1] * 6 + [0] * 2], dtype=jnp.float32)
    impression_attention_mask = jnp.array([[1] * 7 + [0], [1] * S], dtype=jnp.float32)

    out = encoder_forward(finding_input_ids, impression_input_ids,
                          finding_attention_mask, impression_attention_mask, params)
    out = jax.block_until_ready(out)
    assert out.shape == (B, FEATURE_BASE_DIM) and out.dtype == jnp.float32
    assert bool(jnp.all(jnp.isfinite(out)))
    print("KERNEL_OK")
</pallas_src>

<mosaic_0001>
module attributes {stable_mosaic.version = 11 : i64} {
  func.func @fused_encoder_kernel(%arg0: i32, %arg1: memref<32x64xf32, #tpu.memory_space<vmem>>, %arg2: memref<32x32xf32, #tpu.memory_space<vmem>>, %arg3: memref<1x64xf32, #tpu.memory_space<vmem>>, %arg4: memref<1x64xf32, #tpu.memory_space<vmem>>, %arg5: memref<64x192xbf16, #tpu.memory_space<vmem>>, %arg6: memref<1x192xf32, #tpu.memory_space<vmem>>, %arg7: memref<64x64xbf16, #tpu.memory_space<vmem>>, %arg8: memref<1x64xf32, #tpu.memory_space<vmem>>, %arg9: memref<1x64xf32, #tpu.memory_space<vmem>>, %arg10: memref<1x64xf32, #tpu.memory_space<vmem>>, %arg11: memref<64x128xbf16, #tpu.memory_space<vmem>>, %arg12: memref<1x128xf32, #tpu.memory_space<vmem>>, %arg13: memref<128x64xbf16, #tpu.memory_space<vmem>>, %arg14: memref<1x64xf32, #tpu.memory_space<vmem>>, %arg15: memref<1x64xf32, #tpu.memory_space<vmem>>, %arg16: memref<1x64xf32, #tpu.memory_space<vmem>>, %arg17: memref<64x64xbf16, #tpu.memory_space<vmem>>, %arg18: memref<1x64xf32, #tpu.memory_space<vmem>>, %arg19: memref<64x32xbf16, #tpu.memory_space<vmem>>, %arg20: memref<64x32xbf16, #tpu.memory_space<vmem>>, %arg21: memref<1x32xf32, #tpu.memory_space<vmem>>, %arg22: memref<2x32xf32, #tpu.memory_space<vmem>>) attributes {dimension_semantics = [#tpu.dimension_semantics<arbitrary>], iteration_bounds = array<i64: 1>, scalar_prefetch = 0 : i64, scratch_operands = 0 : i64, tpu.core_type = #tpu.core_type<tc>, window_params = [{pipeline_mode = #tpu.pipeline_mode<synchronous>, transform_indices = @transform_0, window_bounds = array<i64: 32, 64>}, {pipeline_mode = #tpu.pipeline_mode<synchronous>, transform_indices = @transform_1, window_bounds = array<i64: 32, 32>}, {pipeline_mode = #tpu.pipeline_mode<synchronous>, transform_indices = @transform_2, window_bounds = array<i64: 1, 64>}, {pipeline_mode = #tpu.pipeline_mode<synchronous>, transform_indices = @transform_3, window_bounds = array<i64: 1, 64>}, {pipeline_mode = #tpu.pipeline_mode<synchronous>, transform_indices = @transform_4, window_bounds = array<i64: 64, 192>}, {pipeline_mode = #tpu.pipeline_mode<synchronous>, transform_indices = @transform_5, window_bounds = array<i64: 1, 192>}, {pipeline_mode = #tpu.pipeline_mode<synchronous>, transform_indices = @transform_6, window_bounds = array<i64: 64, 64>}, {pipeline_mode = #tpu.pipeline_mode<synchronous>, transform_indices = @transform_7, window_bounds = array<i64: 1, 64>}, {pipeline_mode = #tpu.pipeline_mode<synchronous>, transform_indices = @transform_8, window_bounds = array<i64: 1, 64>}, {pipeline_mode = #tpu.pipeline_mode<synchronous>, transform_indices = @transform_9, window_bounds = array<i64: 1, 64>}, {pipeline_mode = #tpu.pipeline_mode<synchronous>, transform_indices = @transform_10, window_bounds = array<i64: 64, 128>}, {pipeline_mode = #tpu.pipeline_mode<synchronous>, transform_indices = @transform_11, window_bounds = array<i64: 1, 128>}, {pipeline_mode = #tpu.pipeline_mode<synchronous>, transform_indices = @transform_12, window_bounds = array<i64: 128, 64>}, {pipeline_mode = #tpu.pipeline_mode<synchronous>, transform_indices = @transform_13, window_bounds = array<i64: 1, 64>}, {pipeline_mode = #tpu.pipeline_mode<synchronous>, transform_indices = @transform_14, window_bounds = array<i64: 1, 64>}, {pipeline_mode = #tpu.pipeline_mode<synchronous>, transform_indices = @transform_15, window_bounds = array<i64: 1, 64>}, {pipeline_mode = #tpu.pipeline_mode<synchronous>, transform_indices = @transform_16, window_bounds = array<i64: 64, 64>}, {pipeline_mode = #tpu.pipeline_mode<synchronous>, transform_indices = @transform_17, window_bounds = array<i64: 1, 64>}, {pipeline_mode = #tpu.pipeline_mode<synchronous>, transform_indices = @transform_18, window_bounds = array<i64: 64, 32>}, {pipeline_mode = #tpu.pipeline_mode<synchronous>, transform_indices = @transform_19, window_bounds = array<i64: 64, 32>}, {pipeline_mode = #tpu.pipeline_mode<synchronous>, transform_indices = @transform_20, window_bounds = array<i64: 1, 32>}, {pipeline_mode = #tpu.pipeline_mode<synchronous>, transform_indices = @transform_21, window_bounds = array<i64: 2, 32>}]} {
    %c0 = arith.constant 0 : index
    %c0_0 = arith.constant 0 : index
    %0 = vector.load %arg1[%c0, %c0_0] : memref<32x64xf32, #tpu.memory_space<vmem>>, vector<32x64xf32>
    %c0_1 = arith.constant 0 : index
    %c0_2 = arith.constant 0 : index
    %1 = vector.load %arg3[%c0_1, %c0_2] : memref<1x64xf32, #tpu.memory_space<vmem>>, vector<1x64xf32>
    %c0_3 = arith.constant 0 : index
    %c0_4 = arith.constant 0 : index
    %2 = vector.load %arg4[%c0_3, %c0_4] : memref<1x64xf32, #tpu.memory_space<vmem>>, vector<1x64xf32>
    %cst = arith.constant dense<0.000000e+00> : vector<32xf32>
    %3 = vector.multi_reduction <add>, %0, %cst [1] : vector<32x64xf32> to vector<32xf32>
    %4 = vector.shape_cast %3 : vector<32xf32> to vector<32x1xf32>
    %cst_5 = arith.constant 6.400000e+01 : f32
    %5 = vector.broadcast %cst_5 : f32 to vector<32x1xf32>
    %6 = arith.divf %4, %5 : vector<32x1xf32>
    %7 = vector.broadcast %6 : vector<32x1xf32> to vector<32x64xf32>
    %8 = arith.subf %0, %7 : vector<32x64xf32>
    %9 = arith.mulf %8, %8 : vector<32x64xf32>
    %cst_6 = arith.constant dense<0.000000e+00> : vector<32xf32>
    %10 = vector.multi_reduction <add>, %9, %cst_6 [1] : vector<32x64xf32> to vector<32xf32>
    %11 = vector.shape_cast %10 : vector<32xf32> to vector<32x1xf32>
    %cst_7 = arith.constant 6.400000e+01 : f32
    %12 = vector.broadcast %cst_7 : f32 to vector<32x1xf32>
    %13 = arith.divf %11, %12 : vector<32x1xf32>
    %14 = vector.broadcast %6 : vector<32x1xf32> to vector<32x64xf32>
    %15 = arith.subf %0, %14 : vector<32x64xf32>
    %cst_8 = arith.constant 9.99999996E-13 : f32
    %16 = vector.broadcast %cst_8 : f32 to vector<32x1xf32>
    %17 = arith.addf %13, %16 : vector<32x1xf32>
    %18 = math.rsqrt %17 : vector<32x1xf32>
    %19 = vector.broadcast %18 : vector<32x1xf32> to vector<32x64xf32>
    %20 = arith.mulf %15, %19 : vector<32x64xf32>
    %21 = vector.broadcast %1 : vector<1x64xf32> to vector<32x64xf32>
    %22 = arith.mulf %20, %21 : vector<32x64xf32>
    %23 = vector.broadcast %2 : vector<1x64xf32> to vector<32x64xf32>
    %24 = arith.addf %22, %23 : vector<32x64xf32>
    %25 = arith.truncf %24 : vector<32x64xf32> to vector<32x64xbf16>
    %c0_9 = arith.constant 0 : index
    %c0_10 = arith.constant 0 : index
    %26 = vector.load %arg5[%c0_9, %c0_10] : memref<64x192xbf16, #tpu.memory_space<vmem>>, vector<64x192xbf16>
    %cst_11 = arith.constant dense<0.000000e+00> : vector<32x192xf32>
    %27 = tpu.matmul %25, %26, %cst_11 {dimension_numbers = #tpu.dot_dimension_numbers<[1], [0], [0], [1], [0, 0, 1, 1], [], []>} : vector<32x64xbf16>, vector<64x192xbf16>, vector<32x192xf32> -> vector<32x192xf32>
    %c0_12 = arith.constant 0 : index
    %c0_13 = arith.constant 0 : index
    %28 = vector.load %arg6[%c0_12, %c0_13] : memref<1x192xf32, #tpu.memory_space<vmem>>, vector<1x192xf32>
    %29 = vector.broadcast %28 : vector<1x192xf32> to vector<32x192xf32>
    %30 = arith.addf %27, %29 : vector<32x192xf32>
    %c0_14 = arith.constant 0 : index
    %c0_15 = arith.constant 0 : index
    %31 = vector.load %arg2[%c0_14, %c0_15] : memref<32x32xf32, #tpu.memory_space<vmem>>, vector<32x32xf32>
    %32 = vector.extract_strided_slice %30 {offsets = [0, 0], sizes = [32, 32], strides = [1, 1]} : vector<32x192xf32> to vector<32x32xf32>
    %33 = arith.truncf %32 : vector<32x32xf32> to vector<32x32xbf16>
    %34 = vector.extract_strided_slice %30 {offsets = [0, 64], sizes = [32, 32], strides = [1, 1]} : vector<32x192xf32> to vector<32x32xf32>
    %35 = arith.truncf %34 : vector<32x32xf32> to vector<32x32xbf16>
    %36 = vector.extract_strided_slice %30 {offsets = [0, 128], sizes = [32, 32], strides = [1, 1]} : vector<32x192xf32> to vector<32x32xf32>
    %37 = arith.truncf %36 : vector<32x32xf32> to vector<32x32xbf16>
    %cst_16 = arith.constant dense<0.000000e+00> : vector<32x32xf32>
    %38 = tpu.matmul %33, %35, %cst_16 {dimension_numbers = #tpu.dot_dimension_numbers<[1], [1], [0], [0], [0, 0, 1, 0], [], []>} : vector<32x32xbf16>, vector<32x32xbf16>, vector<32x32xf32> -> vector<32x32xf32>
    %cst_17 = arith.constant 0.176776692 : f32
    %39 = vector.broadcast %cst_17 : f32 to vector<32x32xf32>
    %40 = arith.mulf %38, %39 : vector<32x32xf32>
    %41 = arith.addf %40, %31 : vector<32x32xf32>
    %cst_18 = arith.constant dense<0xFF800000> : vector<32xf32>
    %42 = vector.multi_reduction <maximumf>, %41, %cst_18 [1] : vector<32x32xf32> to vector<32xf32>
    %43 = vector.shape_cast %42 : vector<32xf32> to vector<32x1xf32>
    %44 = vector.broadcast %43 : vector<32x1xf32> to vector<32x32xf32>
    %45 = arith.subf %41, %44 : vector<32x32xf32>
    %46 = math.exp %45 : vector<32x32xf32>
    %cst_19 = arith.constant dense<0.000000e+00> : vector<32xf32>
    %47 = vector.multi_reduction <add>, %46, %cst_19 [1] : vector<32x32xf32> to vector<32xf32>
    %48 = vector.shape_cast %47 : vector<32xf32> to vector<32x1xf32>
    %49 = tpu.reciprocal %48 {approx = true} : vector<32x1xf32> -> vector<32x1xf32>
    %50 = vector.broadcast %49 : vector<32x1xf32> to vector<32x32xf32>
    %51 = arith.mulf %46, %50 : vector<32x32xf32>
    %52 = arith.truncf %51 : vector<32x32xf32> to vector<32x32xbf16>
    %cst_20 = arith.constant dense<0.000000e+00> : vector<32x32xf32>
    %53 = tpu.matmul %52, %37, %cst_20 {dimension_numbers = #tpu.dot_dimension_numbers<[1], [0], [0], [1], [0, 0, 1, 1], [], []>} : vector<32x32xbf16>, vector<32x32xbf16>, vector<32x32xf32> -> vector<32x32xf32>
    %54 = vector.extract_strided_slice %30 {offsets = [0, 32], sizes = [32, 32], strides = [1, 1]} : vector<32x192xf32> to vector<32x32xf32>
    %55 = arith.truncf %54 : vector<32x32xf32> to vector<32x32xbf16>
    %56 = vector.extract_strided_slice %30 {offsets = [0, 96], sizes = [32, 32], strides = [1, 1]} : vector<32x192xf32> to vector<32x32xf32>
    %57 = arith.truncf %56 : vector<32x32xf32> to vector<32x32xbf16>
    %58 = vector.extract_strided_slice %30 {offsets = [0, 160], sizes = [32, 32], strides = [1, 1]} : vector<32x192xf32> to vector<32x32xf32>
    %59 = arith.truncf %58 : vector<32x32xf32> to vector<32x32xbf16>
    %cst_21 = arith.constant dense<0.000000e+00> : vector<32x32xf32>
    %60 = tpu.matmul %55, %57, %cst_21 {dimension_numbers = #tpu.dot_dimension_numbers<[1], [1], [0], [0], [0, 0, 1, 0], [], []>} : vector<32x32xbf16>, vector<32x32xbf16>, vector<32x32xf32> -> vector<32x32xf32>
    %cst_22 = arith.constant 0.176776692 : f32
    %61 = vector.broadcast %cst_22 : f32 to vector<32x32xf32>
    %62 = arith.mulf %60, %61 : vector<32x32xf32>
    %63 = arith.addf %62, %31 : vector<32x32xf32>
    %cst_23 = arith.constant dense<0xFF800000> : vector<32xf32>
    %64 = vector.multi_reduction <maximumf>, %63, %cst_23 [1] : vector<32x32xf32> to vector<32xf32>
    %65 = vector.shape_cast %64 : vector<32xf32> to vector<32x1xf32>
    %66 = vector.broadcast %65 : vector<32x1xf32> to vector<32x32xf32>
    %67 = arith.subf %63, %66 : vector<32x32xf32>
    %68 = math.exp %67 : vector<32x32xf32>
    %cst_24 = arith.constant dense<0.000000e+00> : vector<32xf32>
    %69 = vector.multi_reduction <add>, %68, %cst_24 [1] : vector<32x32xf32> to vector<32xf32>
    %70 = vector.shape_cast %69 : vector<32xf32> to vector<32x1xf32>
    %71 = tpu.reciprocal %70 {approx = true} : vector<32x1xf32> -> vector<32x1xf32>
    %72 = vector.broadcast %71 : vector<32x1xf32> to vector<32x32xf32>
    %73 = arith.mulf %68, %72 : vector<32x32xf32>
    %74 = arith.truncf %73 : vector<32x32xf32> to vector<32x32xbf16>
    %cst_25 = arith.constant dense<0.000000e+00> : vector<32x32xf32>
    %75 = tpu.matmul %74, %59, %cst_25 {dimension_numbers = #tpu.dot_dimension_numbers<[1], [0], [0], [1], [0, 0, 1, 1], [], []>} : vector<32x32xbf16>, vector<32x32xbf16>, vector<32x32xf32> -> vector<32x32xf32>
    %76 = tpu.concatenate %53, %75 in 1 : vector<32x32xf32>, vector<32x32xf32> -> vector<32x64xf32>
    %77 = arith.truncf %76 : vector<32x64xf32> to vector<32x64xbf16>
    %c0_26 = arith.constant 0 : index
    %c0_27 = arith.constant 0 : index
    %78 = vector.load %arg7[%c0_26, %c0_27] : memref<64x64xbf16, #tpu.memory_space<vmem>>, vector<64x64xbf16>
    %cst_28 = arith.constant dense<0.000000e+00> : vector<32x64xf32>
    %79 = tpu.matmul %77, %78, %cst_28 {dimension_numbers = #tpu.dot_dimension_numbers<[1], [0], [0], [1], [0, 0, 1, 1], [], []>} : vector<32x64xbf16>, vector<64x64xbf16>, vector<32x64xf32> -> vector<32x64xf32>
    %c0_29 = arith.constant 0 : index
    %c0_30 = arith.constant 0 : index
    %80 = vector.load %arg8[%c0_29, %c0_30] : memref<1x64xf32, #tpu.memory_space<vmem>>, vector<1x64xf32>
    %81 = vector.broadcast %80 : vector<1x64xf32> to vector<32x64xf32>
    %82 = arith.addf %79, %81 : vector<32x64xf32>
    %83 = arith.addf %24, %82 : vector<32x64xf32>
    %c0_31 = arith.constant 0 : index
    %c0_32 = arith.constant 0 : index
    %84 = vector.load %arg9[%c0_31, %c0_32] : memref<1x64xf32, #tpu.memory_space<vmem>>, vector<1x64xf32>
    %c0_33 = arith.constant 0 : index
    %c0_34 = arith.constant 0 : index
    %85 = vector.load %arg10[%c0_33, %c0_34] : memref<1x64xf32, #tpu.memory_space<vmem>>, vector<1x64xf32>
    %cst_35 = arith.constant dense<0.000000e+00> : vector<32xf32>
    %86 = vector.multi_reduction <add>, %83, %cst_35 [1] : vector<32x64xf32> to vector<32xf32>
    %87 = vector.shape_cast %86 : vector<32xf32> to vector<32x1xf32>
    %cst_36 = arith.constant 6.400000e+01 : f32
    %88 = vector.broadcast %cst_36 : f32 to vector<32x1xf32>
    %89 = arith.divf %87, %88 : vector<32x1xf32>
    %90 = vector.broadcast %89 : vector<32x1xf32> to vector<32x64xf32>
    %91 = arith.subf %83, %90 : vector<32x64xf32>
    %92 = arith.mulf %91, %91 : vector<32x64xf32>
    %cst_37 = arith.constant dense<0.000000e+00> : vector<32xf32>
    %93 = vector.multi_reduction <add>, %92, %cst_37 [1] : vector<32x64xf32> to vector<32xf32>
    %94 = vector.shape_cast %93 : vector<32xf32> to vector<32x1xf32>
    %cst_38 = arith.constant 6.400000e+01 : f32
    %95 = vector.broadcast %cst_38 : f32 to vector<32x1xf32>
    %96 = arith.divf %94, %95 : vector<32x1xf32>
    %97 = vector.broadcast %89 : vector<32x1xf32> to vector<32x64xf32>
    %98 = arith.subf %83, %97 : vector<32x64xf32>
    %cst_39 = arith.constant 9.99999996E-13 : f32
    %99 = vector.broadcast %cst_39 : f32 to vector<32x1xf32>
    %100 = arith.addf %96, %99 : vector<32x1xf32>
    %101 = math.rsqrt %100 : vector<32x1xf32>
    %102 = vector.broadcast %101 : vector<32x1xf32> to vector<32x64xf32>
    %103 = arith.mulf %98, %102 : vector<32x64xf32>
    %104 = vector.broadcast %84 : vector<1x64xf32> to vector<32x64xf32>
    %105 = arith.mulf %103, %104 : vector<32x64xf32>
    %106 = vector.broadcast %85 : vector<1x64xf32> to vector<32x64xf32>
    %107 = arith.addf %105, %106 : vector<32x64xf32>
    %108 = arith.truncf %107 : vector<32x64xf32> to vector<32x64xbf16>
    %c0_40 = arith.constant 0 : index
    %c0_41 = arith.constant 0 : index
    %109 = vector.load %arg11[%c0_40, %c0_41] : memref<64x128xbf16, #tpu.memory_space<vmem>>, vector<64x128xbf16>
    %cst_42 = arith.constant dense<0.000000e+00> : vector<32x128xf32>
    %110 = tpu.matmul %108, %109, %cst_42 {dimension_numbers = #tpu.dot_dimension_numbers<[1], [0], [0], [1], [0, 0, 1, 1], [], []>} : vector<32x64xbf16>, vector<64x128xbf16>, vector<32x128xf32> -> vector<32x128xf32>
    %c0_43 = arith.constant 0 : index
    %c0_44 = arith.constant 0 : index
    %111 = vector.load %arg12[%c0_43, %c0_44] : memref<1x128xf32, #tpu.memory_space<vmem>>, vector<1x128xf32>
    %112 = vector.broadcast %111 : vector<1x128xf32> to vector<32x128xf32>
    %113 = arith.addf %110, %112 : vector<32x128xf32>
    %114 = arith.mulf %113, %113 : vector<32x128xf32>
    %115 = arith.mulf %113, %114 : vector<32x128xf32>
    %cst_45 = arith.constant 4.471500e-02 : f32
    %116 = vector.broadcast %cst_45 : f32 to vector<32x128xf32>
    %117 = arith.mulf %116, %115 : vector<32x128xf32>
    %118 = arith.addf %113, %117 : vector<32x128xf32>
    %cst_46 = arith.constant 0.797884583 : f32
    %119 = vector.broadcast %cst_46 : f32 to vector<32x128xf32>
    %120 = arith.mulf %119, %118 : vector<32x128xf32>
    %121 = math.tanh %120 : vector<32x128xf32>
    %cst_47 = arith.constant 1.000000e+00 : f32
    %122 = vector.broadcast %cst_47 : f32 to vector<32x128xf32>
    %123 = arith.addf %122, %121 : vector<32x128xf32>
    %cst_48 = arith.constant 5.000000e-01 : f32
    %124 = vector.broadcast %cst_48 : f32 to vector<32x128xf32>
    %125 = arith.mulf %124, %123 : vector<32x128xf32>
    %126 = arith.mulf %113, %125 : vector<32x128xf32>
    %127 = arith.truncf %126 : vector<32x128xf32> to vector<32x128xbf16>
    %c0_49 = arith.constant 0 : index
    %c0_50 = arith.constant 0 : index
    %128 = vector.load %arg13[%c0_49, %c0_50] : memref<128x64xbf16, #tpu.memory_space<vmem>>, vector<128x64xbf16>
    %cst_51 = arith.constant dense<0.000000e+00> : vector<32x64xf32>
    %129 = tpu.matmul %127, %128, %cst_51 {dimension_numbers = #tpu.dot_dimension_numbers<[1], [0], [0], [1], [0, 0, 1, 1], [], []>} : vector<32x128xbf16>, vector<128x64xbf16>, vector<32x64xf32> -> vector<32x64xf32>
    %c0_52 = arith.constant 0 : index
    %c0_53 = arith.constant 0 : index
    %130 = vector.load %arg14[%c0_52, %c0_53] : memref<1x64xf32, #tpu.memory_space<vmem>>, vector<1x64xf32>
    %131 = vector.broadcast %130 : vector<1x64xf32> to vector<32x64xf32>
    %132 = arith.addf %129, %131 : vector<32x64xf32>
    %133 = arith.addf %107, %132 : vector<32x64xf32>
    %c0_54 = arith.constant 0 : index
    %c0_55 = arith.constant 0 : index
    %134 = vector.load %arg15[%c0_54, %c0_55] : memref<1x64xf32, #tpu.memory_space<vmem>>, vector<1x64xf32>
    %c0_56 = arith.constant 0 : index
    %c0_57 = arith.constant 0 : index
    %135 = vector.load %arg16[%c0_56, %c0_57] : memref<1x64xf32, #tpu.memory_space<vmem>>, vector<1x64xf32>
    %cst_58 = arith.constant dense<0.000000e+00> : vector<32xf32>
    %136 = vector.multi_reduction <add>, %133, %cst_58 [1] : vector<32x64xf32> to vector<32xf32>
    %137 = vector.shape_cast %136 : vector<32xf32> to vector<32x1xf32>
    %cst_59 = arith.constant 6.400000e+01 : f32
    %138 = vector.broadcast %cst_59 : f32 to vector<32x1xf32>
    %139 = arith.divf %137, %138 : vector<32x1xf32>
    %140 = vector.broadcast %139 : vector<32x1xf32> to vector<32x64xf32>
    %141 = arith.subf %133, %140 : vector<32x64xf32>
    %142 = arith.mulf %141, %141 : vector<32x64xf32>
    %cst_60 = arith.constant dense<0.000000e+00> : vector<32xf32>
    %143 = vector.multi_reduction <add>, %142, %cst_60 [1] : vector<32x64xf32> to vector<32xf32>
    %144 = vector.shape_cast %143 : vector<32xf32> to vector<32x1xf32>
    %cst_61 = arith.constant 6.400000e+01 : f32
    %145 = vector.broadcast %cst_61 : f32 to vector<32x1xf32>
    %146 = arith.divf %144, %145 : vector<32x1xf32>
    %147 = vector.broadcast %139 : vector<32x1xf32> to vector<32x64xf32>
    %148 = arith.subf %133, %147 : vector<32x64xf32>
    %cst_62 = arith.constant 9.99999996E-13 : f32
    %149 = vector.broadcast %cst_62 : f32 to vector<32x1xf32>
    %150 = arith.addf %146, %149 : vector<32x1xf32>
    %151 = math.rsqrt %150 : vector<32x1xf32>
    %152 = vector.broadcast %151 : vector<32x1xf32> to vector<32x64xf32>
    %153 = arith.mulf %148, %152 : vector<32x64xf32>
    %154 = vector.broadcast %134 : vector<1x64xf32> to vector<32x64xf32>
    %155 = arith.mulf %153, %154 : vector<32x64xf32>
    %156 = vector.broadcast %135 : vector<1x64xf32> to vector<32x64xf32>
    %157 = arith.addf %155, %156 : vector<32x64xf32>
    %158 = vector.shape_cast %157 : vector<32x64xf32> to vector<4x8x64xf32>
    %159 = vector.extract_strided_slice %158 {offsets = [0, 0, 0], sizes = [4, 1, 64], strides = [1, 1, 1]} : vector<4x8x64xf32> to vector<4x1x64xf32>
    %160 = vector.shape_cast %159 : vector<4x1x64xf32> to vector<4x64xf32>
    %161 = arith.truncf %160 : vector<4x64xf32> to vector<4x64xbf16>
    %c0_63 = arith.constant 0 : index
    %c0_64 = arith.constant 0 : index
    %162 = vector.load %arg17[%c0_63, %c0_64] : memref<64x64xbf16, #tpu.memory_space<vmem>>, vector<64x64xbf16>
    %cst_65 = arith.constant dense<0.000000e+00> : vector<4x64xf32>
    %163 = tpu.matmul %161, %162, %cst_65 {dimension_numbers = #tpu.dot_dimension_numbers<[1], [0], [0], [1], [0, 0, 1, 1], [], []>} : vector<4x64xbf16>, vector<64x64xbf16>, vector<4x64xf32> -> vector<4x64xf32>
    %c0_66 = arith.constant 0 : index
    %c0_67 = arith.constant 0 : index
    %164 = vector.load %arg18[%c0_66, %c0_67] : memref<1x64xf32, #tpu.memory_space<vmem>>, vector<1x64xf32>
    %165 = vector.broadcast %164 : vector<1x64xf32> to vector<4x64xf32>
    %166 = arith.addf %163, %165 : vector<4x64xf32>
    %167 = math.tanh %166 : vector<4x64xf32>
    %168 = vector.extract_strided_slice %167 {offsets = [0, 0], sizes = [2, 64], strides = [1, 1]} : vector<4x64xf32> to vector<2x64xf32>
    %169 = arith.truncf %168 : vector<2x64xf32> to vector<2x64xbf16>
    %170 = vector.extract_strided_slice %167 {offsets = [2, 0], sizes = [2, 64], strides = [1, 1]} : vector<4x64xf32> to vector<2x64xf32>
    %171 = arith.truncf %170 : vector<2x64xf32> to vector<2x64xbf16>
    %c0_68 = arith.constant 0 : index
    %c0_69 = arith.constant 0 : index
    %172 = vector.load %arg19[%c0_68, %c0_69] : memref<64x32xbf16, #tpu.memory_space<vmem>>, vector<64x32xbf16>
    %cst_70 = arith.constant dense<0.000000e+00> : vector<2x32xf32>
    %173 = tpu.matmul %169, %172, %cst_70 {dimension_numbers = #tpu.dot_dimension_numbers<[1], [0], [0], [1], [0, 0, 1, 1], [], []>} : vector<2x64xbf16>, vector<64x32xbf16>, vector<2x32xf32> -> vector<2x32xf32>
    %c0_71 = arith.constant 0 : index
    %c0_72 = arith.constant 0 : index
    %174 = vector.load %arg20[%c0_71, %c0_72] : memref<64x32xbf16, #tpu.memory_space<vmem>>, vector<64x32xbf16>
    %cst_73 = arith.constant dense<0.000000e+00> : vector<2x32xf32>
    %175 = tpu.matmul %171, %174, %cst_73 {dimension_numbers = #tpu.dot_dimension_numbers<[1], [0], [0], [1], [0, 0, 1, 1], [], []>} : vector<2x64xbf16>, vector<64x32xbf16>, vector<2x32xf32> -> vector<2x32xf32>
    %176 = arith.addf %173, %175 : vector<2x32xf32>
    %c0_74 = arith.constant 0 : index
    %c0_75 = arith.constant 0 : index
    %177 = vector.load %arg21[%c0_74, %c0_75] : memref<1x32xf32, #tpu.memory_space<vmem>>, vector<1x32xf32>
    %178 = vector.broadcast %177 : vector<1x32xf32> to vector<2x32xf32>
    %179 = arith.addf %176, %178 : vector<2x32xf32>
    %cst_76 = arith.constant 0.000000e+00 : f32
    %180 = vector.broadcast %cst_76 : f32 to vector<2x32xf32>
    %181 = arith.cmpf ogt, %179, %180 : vector<2x32xf32>
    %cst_77 = arith.constant 2.000000e-01 : f32
    %182 = vector.broadcast %cst_77 : f32 to vector<2x32xf32>
    %183 = arith.mulf %182, %179 : vector<2x32xf32>
    %184 = arith.select %181, %179, %183 : vector<2x32xi1>, vector<2x32xf32>
    %c0_78 = arith.constant 0 : index
    %c0_79 = arith.constant 0 : index
    %185 = vector.load %arg22[%c0_78, %c0_79] : memref<2x32xf32, #tpu.memory_space<vmem>>, vector<2x32xf32>
    tpu.vector_store %arg22[%c0_78, %c0_79], %184 {strides = array<i32>} : memref<2x32xf32, #tpu.memory_space<vmem>>, vector<2x32xf32>,
    return
  }
  func.func @transform_0(%arg0: i32) -> (i32, i32) {
    %c0_i32 = arith.constant 0 : i32
    %c0_i32_0 = arith.constant 0 : i32
    %c0_i32_1 = arith.constant 0 : i32
    return %c0_i32, %c0_i32_0 : i32, i32
  }
  func.func @transform_1(%arg0: i32) -> (i32, i32) {
    %c0_i32 = arith.constant 0 : i32
    %c0_i32_0 = arith.constant 0 : i32
    %c0_i32_1 = arith.constant 0 : i32
    return %c0_i32, %c0_i32_0 : i32, i32
  }
  func.func @transform_2(%arg0: i32) -> (i32, i32) {
    %c0_i32 = arith.constant 0 : i32
    %c0_i32_0 = arith.constant 0 : i32
    %c0_i32_1 = arith.constant 0 : i32
    return %c0_i32, %c0_i32_0 : i32, i32
  }
  func.func @transform_3(%arg0: i32) -> (i32, i32) {
    %c0_i32 = arith.constant 0 : i32
    %c0_i32_0 = arith.constant 0 : i32
    %c0_i32_1 = arith.constant 0 : i32
    return %c0_i32, %c0_i32_0 : i32, i32
  }
  func.func @transform_4(%arg0: i32) -> (i32, i32) {
    %c0_i32 = arith.constant 0 : i32
    %c0_i32_0 = arith.constant 0 : i32
    %c0_i32_1 = arith.constant 0 : i32
    return %c0_i32, %c0_i32_0 : i32, i32
  }
  func.func @transform_5(%arg0: i32) -> (i32, i32) {
    %c0_i32 = arith.constant 0 : i32
    %c0_i32_0 = arith.constant 0 : i32
    %c0_i32_1 = arith.constant 0 : i32
    return %c0_i32, %c0_i32_0 : i32, i32
  }
  func.func @transform_6(%arg0: i32) -> (i32, i32) {
    %c0_i32 = arith.constant 0 : i32
    %c0_i32_0 = arith.constant 0 : i32
    %c0_i32_1 = arith.constant 0 : i32
    return %c0_i32, %c0_i32_0 : i32, i32
  }
  func.func @transform_7(%arg0: i32) -> (i32, i32) {
    %c0_i32 = arith.constant 0 : i32
    %c0_i32_0 = arith.constant 0 : i32
    %c0_i32_1 = arith.constant 0 : i32
    return %c0_i32, %c0_i32_0 : i32, i32
  }
  func.func @transform_8(%arg0: i32) -> (i32, i32) {
    %c0_i32 = arith.constant 0 : i32
    %c0_i32_0 = arith.constant 0 : i32
    %c0_i32_1 = arith.constant 0 : i32
    return %c0_i32, %c0_i32_0 : i32, i32
  }
  func.func @transform_9(%arg0: i32) -> (i32, i32) {
    %c0_i32 = arith.constant 0 : i32
    %c0_i32_0 = arith.constant 0 : i32
    %c0_i32_1 = arith.constant 0 : i32
    return %c0_i32, %c0_i32_0 : i32, i32
  }
  func.func @transform_10(%arg0: i32) -> (i32, i32) {
    %c0_i32 = arith.constant 0 : i32
    %c0_i32_0 = arith.constant 0 : i32
    %c0_i32_1 = arith.constant 0 : i32
    return %c0_i32, %c0_i32_0 : i32, i32
  }
  func.func @transform_11(%arg0: i32) -> (i32, i32) {
    %c0_i32 = arith.constant 0 : i32
    %c0_i32_0 = arith.constant 0 : i32
    %c0_i32_1 = arith.constant 0 : i32
    return %c0_i32, %c0_i32_0 : i32, i32
  }
  func.func @transform_12(%arg0: i32) -> (i32, i32) {
    %c0_i32 = arith.constant 0 : i32
    %c0_i32_0 = arith.constant 0 : i32
    %c0_i32_1 = arith.constant 0 : i32
    return %c0_i32, %c0_i32_0 : i32, i32
  }
  func.func @transform_13(%arg0: i32) -> (i32, i32) {
    %c0_i32 = arith.constant 0 : i32
    %c0_i32_0 = arith.constant 0 : i32
    %c0_i32_1 = arith.constant 0 : i32
    return %c0_i32, %c0_i32_0 : i32, i32
  }
  func.func @transform_14(%arg0: i32) -> (i32, i32) {
    %c0_i32 = arith.constant 0 : i32
    %c0_i32_0 = arith.constant 0 : i32
    %c0_i32_1 = arith.constant 0 : i32
    return %c0_i32, %c0_i32_0 : i32, i32
  }
  func.func @transform_15(%arg0: i32) -> (i32, i32) {
    %c0_i32 = arith.constant 0 : i32
    %c0_i32_0 = arith.constant 0 : i32
    %c0_i32_1 = arith.constant 0 : i32
    return %c0_i32, %c0_i32_0 : i32, i32
  }
  func.func @transform_16(%arg0: i32) -> (i32, i32) {
    %c0_i32 = arith.constant 0 : i32
    %c0_i32_0 = arith.constant 0 : i32
    %c0_i32_1 = arith.constant 0 : i32
    return %c0_i32, %c0_i32_0 : i32, i32
  }
  func.func @transform_17(%arg0: i32) -> (i32, i32) {
    %c0_i32 = arith.constant 0 : i32
    %c0_i32_0 = arith.constant 0 : i32
    %c0_i32_1 = arith.constant 0 : i32
    return %c0_i32, %c0_i32_0 : i32, i32
  }
  func.func @transform_18(%arg0: i32) -> (i32, i32) {
    %c0_i32 = arith.constant 0 : i32
    %c0_i32_0 = arith.constant 0 : i32
    %c0_i32_1 = arith.constant 0 : i32
    return %c0_i32, %c0_i32_0 : i32, i32
  }
  func.func @transform_19(%arg0: i32) -> (i32, i32) {
    %c0_i32 = arith.constant 0 : i32
    %c0_i32_0 = arith.constant 0 : i32
    %c0_i32_1 = arith.constant 0 : i32
    return %c0_i32, %c0_i32_0 : i32, i32
  }
  func.func @transform_20(%arg0: i32) -> (i32, i32) {
    %c0_i32 = arith.constant 0 : i32
    %c0_i32_0 = arith.constant 0 : i32
    %c0_i32_1 = arith.constant 0 : i32
    return %c0_i32, %c0_i32_0 : i32, i32
  }
  func.func @transform_21(%arg0: i32) -> (i32, i32) {
    %c0_i32 = arith.constant 0 : i32
    %c0_i32_0 = arith.constant 0 : i32
    %c0_i32_1 = arith.constant 0 : i32
    return %c0_i32, %c0_i32_0 : i32, i32
  }
}

</mosaic_0001>

<llo_original>
// kernel: tpu_custom_call.1
$region0: #{tpu_custom_call.1}
  #allocation0 [shape = 'u32[]', space=smem, size = 0x4, offset = 0x4, fixed_abs, tag = 'smem constant byte address 0x4 - core index']
  #allocation1 [shape = 'u32[72,128]{1,0:T(1,128)}', space=vmem, size = 0x9000, scoped, tag = 'internal scratch']
  %s0 = inlined_call_operand.vmem [shape: f32[32,64], index: 0, kind: input, shape index: {}]
  %s1 = inlined_call_operand.vmem [shape: f32[32,32], index: 1, kind: input, shape index: {}]
  %s2 = inlined_call_operand.hbm [shape: f32[1,64], index: 2, kind: input, shape index: {}]
  %s3 = inlined_call_operand.vmem [shape: f32[1,64], index: 3, kind: input, shape index: {}]
  %s4 = inlined_call_operand.vmem [shape: bf16[64,192], index: 4, kind: input, shape index: {}]
  %s5 = inlined_call_operand.hbm [shape: f32[1,192], index: 5, kind: input, shape index: {}]
  %s6 = inlined_call_operand.vmem [shape: bf16[64,64], index: 6, kind: input, shape index: {}]
  %s7 = inlined_call_operand.hbm [shape: f32[1,64], index: 7, kind: input, shape index: {}]
  %s8 = inlined_call_operand.hbm [shape: f32[1,64], index: 8, kind: input, shape index: {}]
  %s9 = inlined_call_operand.hbm [shape: f32[1,64], index: 9, kind: input, shape index: {}]
  %s10 = inlined_call_operand.vmem [shape: bf16[64,128], index: 10, kind: input, shape index: {}]
  %s11 = inlined_call_operand.hbm [shape: f32[1,128], index: 11, kind: input, shape index: {}]
  %s12 = inlined_call_operand.vmem [shape: bf16[128,64], index: 12, kind: input, shape index: {}]
  %s13 = inlined_call_operand.hbm [shape: f32[1,64], index: 13, kind: input, shape index: {}]
  %s14 = inlined_call_operand.hbm [shape: f32[1,64], index: 14, kind: input, shape index: {}]
  %s15 = inlined_call_operand.hbm [shape: f32[1,64], index: 15, kind: input, shape index: {}]
  %s16 = inlined_call_operand.hbm [shape: bf16[64,64], index: 16, kind: input, shape index: {}]
  %s17 = inlined_call_operand.hbm [shape: f32[1,64], index: 17, kind: input, shape index: {}]
  %s18 = inlined_call_operand.vmem [shape: bf16[64,32], index: 18, kind: input, shape index: {}]
  %s19 = inlined_call_operand.vmem [shape: bf16[64,32], index: 19, kind: input, shape index: {}]
  %s20 = inlined_call_operand.hbm [shape: f32[1,32], index: 20, kind: input, shape index: {}]
  %s21 = inlined_call_operand.hbm [shape: f32[2,32], index: 21, kind: output, shape index: {}]
  %s22 = sld [smem:[#allocation0]]
  $region142: #{tpu_custom_call.1} parent=0
    _
  %s24 = ssub.s32 1, %s22
  %s25 = scalar_select 0, %s24, %s22
  $region1: #{tpu_custom_call.1} parent=0
    #allocation2 [shape = 'u8[512]{0}', space=vmem, size = 0x400, scoped, tag = 'input window, operand 2, single buffered']
    #allocation3 [shape = 's32[1]{0}', space=sflag, size = 0x4, scoped, tag = 'scoped memory for tpu_custom_call.1']
    #allocation4 [shape = 's32[1]{0}', space=sflag, size = 0x4, scoped, tag = 'scoped memory for tpu_custom_call.1']
    #allocation5 [shape = 'u8[1024]{0}', space=vmem, size = 0x400, scoped, tag = 'input window, operand 5, single buffered']
    #allocation6 [shape = 's32[1]{0}', space=sflag, size = 0x4, scoped, tag = 'scoped memory for tpu_custom_call.1']
    #allocation7 [shape = 'u8[512]{0}', space=vmem, size = 0x400, scoped, tag = 'input window, operand 7, single buffered']
    #allocation8 [shape = 'u8[512]{0}', space=vmem, size = 0x400, scoped, tag = 'input window, operand 8, single buffered']
    #allocation9 [shape = 's32[1]{0}', space=sflag, size = 0x4, scoped, tag = 'scoped memory for tpu_custom_call.1']
    #allocation10 [shape = 'u8[512]{0}', space=vmem, size = 0x400, scoped, tag = 'input window, operand 9, single buffered']
    #allocation11 [shape = 'u8[512]{0}', space=vmem, size = 0x400, scoped, tag = 'input window, operand 11, single buffered']
    #allocation12 [shape = 's32[1]{0}', space=sflag, size = 0x4, scoped, tag = 'scoped memory for tpu_custom_call.1']
    #allocation13 [shape = 'u8[512]{0}', space=vmem, size = 0x400, scoped, tag = 'input window, operand 13, single buffered']
    #allocation14 [shape = 'u8[512]{0}', space=vmem, size = 0x400, scoped, tag = 'input window, operand 14, single buffered']
    #allocation15 [shape = 's32[1]{0}', space=sflag, size = 0x4, scoped, tag = 'scoped memory for tpu_custom_call.1']
    #allocation16 [shape = 'u8[512]{0}', space=vmem, size = 0x400, scoped, tag = 'input window, operand 15, single buffered']
    #allocation17 [shape = 'u8[16384]{0}', space=vmem, size = 0x4000, scoped, tag = 'input window, operand 16, single buffered']
    #allocation18 [shape = 's32[1]{0}', space=sflag, size = 0x4, scoped, tag = 'scoped memory for tpu_custom_call.1']
    #allocation19 [shape = 'u8[512]{0}', space=vmem, size = 0x400, scoped, tag = 'input window, operand 17, single buffered']
    #allocation20 [shape = 'u8[512]{0}', space=vmem, size = 0x400, scoped, tag = 'input window, operand 20, single buffered']
    #allocation21 [shape = 's32[1]{0}', space=sflag, size = 0x4, scoped, tag = 'scoped memory for tpu_custom_call.1']
    #allocation22 [shape = 'u8[1024]{0}', space=vmem, size = 0x400, scoped, tag = 'output window, operand 0, single buffered']
    %26 = vsyncpa [#allocation3], 0
    %27 = vsyncpa [#allocation6], 0
    %28 = vsyncpa [#allocation9], 0
    %29 = vsyncpa [#allocation12], 0
    %30 = vsyncpa [#allocation15], 0
    %31 = vsyncpa [#allocation18], 0
    %32 = vsyncpa [#allocation21], 0
    %33 = vsyncpa [#allocation4], 0
    // Predicated region
    $region2: #{tpu_custom_call.1} parent=1 // pred_check
      _
    $region3: #{tpu_custom_call.1} parent=1 // pred_check_branch
      %35 = sbr.rel (0) target = $region5
    $region4: #{tpu_custom_call.1} parent=1 // pred_region
      _
    $region5: #{tpu_custom_call.1} parent=1 // pred_fallthru
      _
    // Predicated region
    $region6: #{tpu_custom_call.1} parent=1 // pred_check
      _
    $region7: #{tpu_custom_call.1} parent=1 // pred_check_branch
      %37 = sbr.rel (0) target = $region9
    $region8: #{tpu_custom_call.1} parent=1 // pred_region
      _
    $region9: #{tpu_custom_call.1} parent=1 // pred_fallthru
      _
    // Predicated region
    $region10: #{tpu_custom_call.1} parent=1 // pred_check
      _
    $region11: #{tpu_custom_call.1} parent=1 // pred_check_branch
      %39 = sbr.rel (0) target = $region13
    $region12: #{tpu_custom_call.1} parent=1 // pred_region
      %41 = vsyncadd [#allocation3], 0
      %s43 = sshll.u32 %s2, 4
      %s44 = int_to_ptr.hbm [resolvable:$true] %s43
      %s45 = sshll.u32 [#allocation2], 4
      %s46 = int_to_ptr.vmem [resolvable:$true] %s45
      %48 = dma.hbm_to_vmem [thread:$0]  %s44, 16, %s46, [#allocation3]
    $region13: #{tpu_custom_call.1} parent=1 // pred_fallthru
      _
    // Predicated region
    $region14: #{tpu_custom_call.1} parent=1 // pred_check
      _
    $region15: #{tpu_custom_call.1} parent=1 // pred_check_branch
      %50 = sbr.rel (0) target = $region17
    $region16: #{tpu_custom_call.1} parent=1 // pred_region
      _
    $region17: #{tpu_custom_call.1} parent=1 // pred_fallthru
      _
    // Predicated region
    $region18: #{tpu_custom_call.1} parent=1 // pred_check
      _
    $region19: #{tpu_custom_call.1} parent=1 // pred_check_branch
      %52 = sbr.rel (0) target = $region21
    $region20: #{tpu_custom_call.1} parent=1 // pred_region
      _
    $region21: #{tpu_custom_call.1} parent=1 // pred_fallthru
      _
    // Predicated region
    $region22: #{tpu_custom_call.1} parent=1 // pred_check
      _
    $region23: #{tpu_custom_call.1} parent=1 // pred_check_branch
      %54 = sbr.rel (0) target = $region25
    $region24: #{tpu_custom_call.1} parent=1 // pred_region
      %56 = vsyncadd [#allocation6], 0
      %s58 = sshll.u32 %s5, 4
      %s59 = int_to_ptr.hbm [resolvable:$true] %s58
      %s60 = sshll.u32 [#allocation5], 4
      %s61 = int_to_ptr.vmem [resolvable:$true] %s60
      %63 = dma.hbm_to_vmem [thread:$0]  %s59, 32, %s61, [#allocation6]
    $region25: #{tpu_custom_call.1} parent=1 // pred_fallthru
      _
    // Predicated region
    $region26: #{tpu_custom_call.1} parent=1 // pred_check
      _
    $region27: #{tpu_custom_call.1} parent=1 // pred_check_branch
      %65 = sbr.rel (0) target = $region29
    $region28: #{tpu_custom_call.1} parent=1 // pred_region
      _
    $region29: #{tpu_custom_call.1} parent=1 // pred_fallthru
      _
    // Predicated region
    $region30: #{tpu_custom_call.1} parent=1 // pred_check
      _
    $region31: #{tpu_custom_call.1} parent=1 // pred_check_branch
      %67 = sbr.rel (0) target = $region33
    $region32: #{tpu_custom_call.1} parent=1 // pred_region
      %69 = vsyncadd [#allocation6], 0
      %s71 = sshll.u32 %s7, 4
      %s72 = int_to_ptr.hbm [resolvable:$true] %s71
      %s73 = sshll.u32 [#allocation7], 4
      %s74 = int_to_ptr.vmem [resolvable:$true] %s73
      %76 = dma.hbm_to_vmem [thread:$0]  %s72, 16, %s74, [#allocation6]
    $region33: #{tpu_custom_call.1} parent=1 // pred_fallthru
      _
    // Predicated region
    $region34: #{tpu_custom_call.1} parent=1 // pred_check
      _
    $region35: #{tpu_custom_call.1} parent=1 // pred_check_branch
      %78 = sbr.rel (0) target = $region37
    $region36: #{tpu_custom_call.1} parent=1 // pred_region
      %80 = vsyncadd [#allocation9], 0
      %s82 = sshll.u32 %s8, 4
      %s83 = int_to_ptr.hbm [resolvable:$true] %s82
      %s84 = sshll.u32 [#allocation8], 4
      %s85 = int_to_ptr.vmem [resolvable:$true] %s84
      %87 = dma.hbm_to_vmem [thread:$0]  %s83, 16, %s85, [#allocation9]
    $region37: #{tpu_custom_call.1} parent=1 // pred_fallthru
      _
    // Predicated region
    $region38: #{tpu_custom_call.1} parent=1 // pred_check
      _
    $region39: #{tpu_custom_call.1} parent=1 // pred_check_branch
      %89 = sbr.rel (0) target = $region41
    $region40: #{tpu_custom_call.1} parent=1 // pred_region
      %91 = vsyncadd [#allocation9], 0
      %s93 = sshll.u32 %s9, 4
      %s94 = int_to_ptr.hbm [resolvable:$true] %s93
      %s95 = sshll.u32 [#allocation10], 4
      %s96 = int_to_ptr.vmem [resolvable:$true] %s95
      %98 = dma.hbm_to_vmem [thread:$0]  %s94, 16, %s96, [#allocation9]
    $region41: #{tpu_custom_call.1} parent=1 // pred_fallthru
      _
    // Predicated region
    $region42: #{tpu_custom_call.1} parent=1 // pred_check
      _
    $region43: #{tpu_custom_call.1} parent=1 // pred_check_branch
      %100 = sbr.rel (0) target = $region45
    $region44: #{tpu_custom_call.1} parent=1 // pred_region
      _
    $region45: #{tpu_custom_call.1} parent=1 // pred_fallthru
      _
    // Predicated region
    $region46: #{tpu_custom_call.1} parent=1 // pred_check
      _
    $region47: #{tpu_custom_call.1} parent=1 // pred_check_branch
      %102 = sbr.rel (0) target = $region49
    $region48: #{tpu_custom_call.1} parent=1 // pred_region
      %104 = vsyncadd [#allocation12], 0
      %s106 = sshll.u32 %s11, 4
      %s107 = int_to_ptr.hbm [resolvable:$true] %s106
      %s108 = sshll.u32 [#allocation11], 4
      %s109 = int_to_ptr.vmem [resolvable:$true] %s108
      %111 = dma.hbm_to_vmem [thread:$0]  %s107, 16, %s109, [#allocation12]
    $region49: #{tpu_custom_call.1} parent=1 // pred_fallthru
      _
    // Predicated region
    $region50: #{tpu_custom_call.1} parent=1 // pred_check
      _
    $region51: #{tpu_custom_call.1} parent=1 // pred_check_branch
      %113 = sbr.rel (0) target = $region53
    $region52: #{tpu_custom_call.1} parent=1 // pred_region
      _
    $region53: #{tpu_custom_call.1} parent=1 // pred_fallthru
      _
    // Predicated region
    $region54: #{tpu_custom_call.1} parent=1 // pred_check
      _
    $region55: #{tpu_custom_call.1} parent=1 // pred_check_branch
      %115 = sbr.rel (0) target = $region57
    $region56: #{tpu_custom_call.1} parent=1 // pred_region
      %117 = vsyncadd [#allocation12], 0
      %s119 = sshll.u32 %s13, 4
      %s120 = int_to_ptr.hbm [resolvable:$true] %s119
      %s121 = sshll.u32 [#allocation13], 4
      %s122 = int_to_ptr.vmem [resolvable:$true] %s121
      %124 = dma.hbm_to_vmem [thread:$0]  %s120, 16, %s122, [#allocation12]
    $region57: #{tpu_custom_call.1} parent=1 // pred_fallthru
      _
    // Predicated region
    $region58: #{tpu_custom_call.1} parent=1 // pred_check
      _
    $region59: #{tpu_custom_call.1} parent=1 // pred_check_branch
      %126 = sbr.rel (0) target = $region61
    $region60: #{tpu_custom_call.1} parent=1 // pred_region
      %128 = vsyncadd [#allocation15], 0
      %s130 = sshll.u32 %s14, 4
      %s131 = int_to_ptr.hbm [resolvable:$true] %s130
      %s132 = sshll.u32 [#allocation14], 4
      %s133 = int_to_ptr.vmem [resolvable:$true] %s132
      %135 = dma.hbm_to_vmem [thread:$0]  %s131, 16, %s133, [#allocation15]
    $region61: #{tpu_custom_call.1} parent=1 // pred_fallthru
      _
    // Predicated region
    $region62: #{tpu_custom_call.1} parent=1 // pred_check
      _
    $region63: #{tpu_custom_call.1} parent=1 // pred_check_branch
      %137 = sbr.rel (0) target = $region65
    $region64: #{tpu_custom_call.1} parent=1 // pred_region
      %139 = vsyncadd [#allocation15], 0
      %s141 = sshll.u32 %s15, 4
      %s142 = int_to_ptr.hbm [resolvable:$true] %s141
      %s143 = sshll.u32 [#allocation16], 4
      %s144 = int_to_ptr.vmem [resolvable:$true] %s143
      %146 = dma.hbm_to_vmem [thread:$0]  %s142, 16, %s144, [#allocation15]
    $region65: #{tpu_custom_call.1} parent=1 // pred_fallthru
      _
    // Predicated region
    $region66: #{tpu_custom_call.1} parent=1 // pred_check
      _
    $region67: #{tpu_custom_call.1} parent=1 // pred_check_branch
      %148 = sbr.rel (0) target = $region69
    $region68: #{tpu_custom_call.1} parent=1 // pred_region
      %150 = vsyncadd [#allocation18], 0
      %s151 = sshll.u32 %s16, 4
      %s152 = int_to_ptr.hbm [resolvable:$true] %s151
      %s153 = sshll.u32 [#allocation17], 4
      %s154 = int_to_ptr.vmem [resolvable:$true] %s153
      %159 = dma.hbm_to_vmem [thread:$0]  %s152, 512, %s154, [#allocation18], 64, 64, 4
    $region69: #{tpu_custom_call.1} parent=1 // pred_fallthru
      _
    // Predicated region
    $region70: #{tpu_custom_call.1} parent=1 // pred_check
      _
    $region71: #{tpu_custom_call.1} parent=1 // pred_check_branch
      %161 = sbr.rel (0) target = $region73
    $region72: #{tpu_custom_call.1} parent=1 // pred_region
      %163 = vsyncadd [#allocation18], 0
      %s165 = sshll.u32 %s17, 4
      %s166 = int_to_ptr.hbm [resolvable:$true] %s165
      %s167 = sshll.u32 [#allocation19], 4
      %s168 = int_to_ptr.vmem [resolvable:$true] %s167
      %170 = dma.hbm_to_vmem [thread:$0]  %s166, 16, %s168, [#allocation18]
    $region73: #{tpu_custom_call.1} parent=1 // pred_fallthru
      _
    // Predicated region
    $region74: #{tpu_custom_call.1} parent=1 // pred_check
      _
    $region75: #{tpu_custom_call.1} parent=1 // pred_check_branch
      %172 = sbr.rel (0) target = $region77
    $region76: #{tpu_custom_call.1} parent=1 // pred_region
      _
    $region77: #{tpu_custom_call.1} parent=1 // pred_fallthru
      _
    // Predicated region
    $region78: #{tpu_custom_call.1} parent=1 // pred_check
      _
    $region79: #{tpu_custom_call.1} parent=1 // pred_check_branch
      %174 = sbr.rel (0) target = $region81
    $region80: #{tpu_custom_call.1} parent=1 // pred_region
      _
    $region81: #{tpu_custom_call.1} parent=1 // pred_fallthru
      _
    // Predicated region
    $region82: #{tpu_custom_call.1} parent=1 // pred_check
      _
    $region83: #{tpu_custom_call.1} parent=1 // pred_check_branch
      %176 = sbr.rel (0) target = $region85
    $region84: #{tpu_custom_call.1} parent=1 // pred_region
      %178 = vsyncadd [#allocation21], 0
      %s180 = sshll.u32 %s20, 4
      %s181 = int_to_ptr.hbm [resolvable:$true] %s180
      %s182 = sshll.u32 [#allocation20], 4
      %s183 = int_to_ptr.vmem [resolvable:$true] %s182
      %185 = dma.hbm_to_vmem [thread:$0]  %s181, 16, %s183, [#allocation21]
    $region85: #{tpu_custom_call.1} parent=1 // pred_fallthru
      _
    // Predicated region
    $region86: #{tpu_custom_call.1} parent=1 // pred_check
      _
    $region87: #{tpu_custom_call.1} parent=1 // pred_check_branch
      %187 = sbr.rel (0) target = $region89
    $region88: #{tpu_custom_call.1} parent=1 // pred_region
      %189 = dma.done [#allocation3], 16
    $region89: #{tpu_custom_call.1} parent=1 // pred_fallthru
      _
    // Predicated region
    $region90: #{tpu_custom_call.1} parent=1 // pred_check
      _
    $region91: #{tpu_custom_call.1} parent=1 // pred_check_branch
      %191 = sbr.rel (0) target = $region93
    $region92: #{tpu_custom_call.1} parent=1 // pred_region
      %193 = dma.done [#allocation6], 32
    $region93: #{tpu_custom_call.1} parent=1 // pred_fallthru
      _
    // Predicated region
    $region94: #{tpu_custom_call.1} parent=1 // pred_check
      _
    $region95: #{tpu_custom_call.1} parent=1 // pred_check_branch
      %195 = sbr.rel (0) target = $region97
    $region96: #{tpu_custom_call.1} parent=1 // pred_region
      %197 = dma.done [#allocation6], 16
    $region97: #{tpu_custom_call.1} parent=1 // pred_fallthru
      _
    // Predicated region
    $region98: #{tpu_custom_call.1} parent=1 // pred_check
      _
    $region99: #{tpu_custom_call.1} parent=1 // pred_check_branch
      %199 = sbr.rel (0) target = $region101
    $region100: #{tpu_custom_call.1} parent=1 // pred_region
      %201 = dma.done [#allocation9], 16
    $region101: #{tpu_custom_call.1} parent=1 // pred_fallthru
      _
    // Predicated region
    $region102: #{tpu_custom_call.1} parent=1 // pred_check
      _
    $region103: #{tpu_custom_call.1} parent=1 // pred_check_branch
      %203 = sbr.rel (0) target = $region105
    $region104: #{tpu_custom_call.1} parent=1 // pred_region
      %205 = dma.done [#allocation9], 16
    $region105: #{tpu_custom_call.1} parent=1 // pred_fallthru
      _
    // Predicated region
    $region106: #{tpu_custom_call.1} parent=1 // pred_check
      _
    $region107: #{tpu_custom_call.1} parent=1 // pred_check_branch
      %207 = sbr.rel (0) target = $region109
    $region108: #{tpu_custom_call.1} parent=1 // pred_region
      %209 = dma.done [#allocation12], 16
    $region109: #{tpu_custom_call.1} parent=1 // pred_fallthru
      _
    // Predicated region
    $region110: #{tpu_custom_call.1} parent=1 // pred_check
      _
    $region111: #{tpu_custom_call.1} parent=1 // pred_check_branch
      %211 = sbr.rel (0) target = $region113
    $region112: #{tpu_custom_call.1} parent=1 // pred_region
      %213 = dma.done [#allocation12], 16
    $region113: #{tpu_custom_call.1} parent=1 // pred_fallthru
      _
    // Predicated region
    $region114: #{tpu_custom_call.1} parent=1 // pred_check
      _
    $region115: #{tpu_custom_call.1} parent=1 // pred_check_branch
      %215 = sbr.rel (0) target = $region117
    $region116: #{tpu_custom_call.1} parent=1 // pred_region
      %217 = dma.done [#allocation15], 16
    $region117: #{tpu_custom_call.1} parent=1 // pred_fallthru
      _
    // Predicated region
    $region118: #{tpu_custom_call.1} parent=1 // pred_check
      _
    $region119: #{tpu_custom_call.1} parent=1 // pred_check_branch
      %219 = sbr.rel (0) target = $region121
    $region120: #{tpu_custom_call.1} parent=1 // pred_region
      %221 = dma.done [#allocation15], 16
    $region121: #{tpu_custom_call.1} parent=1 // pred_fallthru
      _
    // Predicated region
    $region122: #{tpu_custom_call.1} parent=1 // pred_check
      _
    $region123: #{tpu_custom_call.1} parent=1 // pred_check_branch
      %223 = sbr.rel (0) target = $region125
    $region124: #{tpu_custom_call.1} parent=1 // pred_region
      %225 = dma.done [#allocation18], 512
    $region125: #{tpu_custom_call.1} parent=1 // pred_fallthru
      _
    // Predicated region
    $region126: #{tpu_custom_call.1} parent=1 // pred_check
      _
    $region127: #{tpu_custom_call.1} parent=1 // pred_check_branch
      %227 = sbr.rel (0) target = $region129
    $region128: #{tpu_custom_call.1} parent=1 // pred_region
      %229 = dma.done [#allocation18], 16
    $region129: #{tpu_custom_call.1} parent=1 // pred_fallthru
      _
    // Predicated region
    $region130: #{tpu_custom_call.1} parent=1 // pred_check
      _
    $region131: #{tpu_custom_call.1} parent=1 // pred_check_branch
      %231 = sbr.rel (0) target = $region133
    $region132: #{tpu_custom_call.1} parent=1 // pred_region
      %233 = dma.done [#allocation21], 16
    $region133: #{tpu_custom_call.1} parent=1 // pred_fallthru
      _
    %v235 = vld [vmem:[%s0] sm:$0xff]
    %v236 = vld [vmem:[%s0 + $0x8] sm:$0xff]
    %v237 = vld [vmem:[%s0 + $0x10] sm:$0xff]
    %v238 = vld [vmem:[%s0 + $0x18] sm:$0xff]
    %v239 = vld [vmem:[#allocation2] sm:$0x1]
    %v240 = vld [vmem:[%s3] sm:$0x1]
    %vm241 = vcmask 523264
    %v242 = vsel %vm241, %v235, 0.0
    %243 = vadd.xlane.f32.xlu0 %v242
    %v244 = vpop.xlane.xlu0 %243
    %v245 = vsel %vm241, %v236, 0.0
    %246 = vadd.xlane.f32.xlu0 %v245
    %v247 = vpop.xlane.xlu0 %246
    %v248 = vsel %vm241, %v237, 0.0
    %249 = vadd.xlane.f32.xlu0 %v248
    %v250 = vpop.xlane.xlu0 %249
    %v251 = vsel %vm241, %v238, 0.0
    %252 = vadd.xlane.f32.xlu0 %v251
    %v253 = vpop.xlane.xlu0 %252
    %v254 = vrcp.pop 64.0
    %v255 = vmul.f32 64.0, %v254
    %v256 = vsub.f32 1.0, %v255
    %v257 = vmul.f32 %v254, %v256
    %v258 = vadd.f32 %v254, %v257
    %vm259 = vweird.f32 %v254
    %v260 = vsel %vm259, %v254, %v258
    %v261 = vmul.f32 %v244, %v260
    %v262 = vmul.f32 %v247, %v260
    %v263 = vmul.f32 %v250, %v260
    %v264 = vmul.f32 %v253, %v260
    %v265 = vsub.f32 %v235, %v261
    %v266 = vsub.f32 %v236, %v262
    %v267 = vsub.f32 %v237, %v263
    %v268 = vsub.f32 %v238, %v264
    %v269 = vmul.f32 %v265, %v265
    %v270 = vmul.f32 %v266, %v266
    %v271 = vmul.f32 %v267, %v267
    %v272 = vmul.f32 %v268, %v268
    %v273 = vsel %vm241, %v269, 0.0
    %274 = vadd.xlane.f32.xlu0 %v273
    %v275 = vpop.xlane.xlu0 %274
    %v276 = vsel %vm241, %v270, 0.0
    %277 = vadd.xlane.f32.xlu0 %v276
    %v278 = vpop.xlane.xlu0 %277
    %v279 = vsel %vm241, %v271, 0.0
    %280 = vadd.xlane.f32.xlu0 %v279
    %v281 = vpop.xlane.xlu0 %280
    %v282 = vsel %vm241, %v272, 0.0
    %283 = vadd.xlane.f32.xlu0 %v282
    %v284 = vpop.xlane.xlu0 %283
    %v285 = vmul.f32 %v275, %v260
    %v286 = vmul.f32 %v278, %v260
    %v287 = vmul.f32 %v281, %v260
    %v288 = vmul.f32 %v284, %v260
    %v289 = vadd.f32 %v285, 1e-12
    %v290 = vadd.f32 %v286, 1e-12
    %v291 = vadd.f32 %v287, 1e-12
    %v292 = vadd.f32 %v288, 1e-12
    %v293 = vrsqrt.pop %v289
    %v294 = vmul.f32 %v293, %v289
    %v295 = vmul.f32 %v294, %v293
    %v296 = vmul.f32 0.5, %v295
    %v297 = vsub.f32 1.5, %v296
    %v298 = vmul.f32 %v293, %v297
    %vm299 = vweird.f32 %v289
    %vm300 = vweird.f32 %v293
    %vm301 = vmor %vm299, %vm300
    %v302 = vsel %vm301, %v293, %v298
    %v303 = vrsqrt.pop %v290
    %v304 = vmul.f32 %v303, %v290
    %v305 = vmul.f32 %v304, %v303
    %v306 = vmul.f32 0.5, %v305
    %v307 = vsub.f32 1.5, %v306
    %v308 = vmul.f32 %v303, %v307
    %vm309 = vweird.f32 %v290
    %vm310 = vweird.f32 %v303
    %vm311 = vmor %vm309, %vm310
    %v312 = vsel %vm311, %v303, %v308
    %v313 = vrsqrt.pop %v291
    %v314 = vmul.f32 %v313, %v291
    %v315 = vmul.f32 %v314, %v313
    %v316 = vmul.f32 0.5, %v315
    %v317 = vsub.f32 1.5, %v316
    %v318 = vmul.f32 %v313, %v317
    %vm319 = vweird.f32 %v291
    %vm320 = vweird.f32 %v313
    %vm321 = vmor %vm319, %vm320
    %v322 = vsel %vm321, %v313, %v318
    %v323 = vrsqrt.pop %v292
    %v324 = vmul.f32 %v323, %v292
    %v325 = vmul.f32 %v324, %v323
    %v326 = vmul.f32 0.5, %v325
    %v327 = vsub.f32 1.5, %v326
    %v328 = vmul.f32 %v323, %v327
    %vm329 = vweird.f32 %v292
    %vm330 = vweird.f32 %v323
    %vm331 = vmor %vm329, %vm330
    %v332 = vsel %vm331, %v323, %v328
    %v333 = vmul.f32 %v265, %v302
    %v334 = vmul.f32 %v266, %v312
    %v335 = vmul.f32 %v267, %v322
    %v336 = vmul.f32 %v268, %v332
    %v338 = vperm.slane %v239, 0
    %v340 = vmul.f32 %v333, %v338
    %v341 = vmul.f32 %v334, %v338
    %v342 = vmul.f32 %v335, %v338
    %v343 = vmul.f32 %v336, %v338
    %v345 = vperm.slane %v240, 0
    %v347 = vadd.f32 %v340, %v345
    %v348 = vadd.f32 %v341, %v345
    %v349 = vadd.f32 %v342, %v345
    %v350 = vadd.f32 %v343, %v345
    %v351 = vpack.c.bf16 %v348, %v347
    %v352 = vpack.c.bf16 %v350, %v349
    %v353 = vld [vmem:[%s4] sm:$0xff]
    %v354 = vld [vmem:[%s4 + $0x8] sm:$0xff]
    %v355 = vld [vmem:[%s4 + $0x10] sm:$0xff]
    %v356 = vld [vmem:[%s4 + $0x18] sm:$0xff]
    %v357 = vld [vmem:[%s4 + $0x20] sm:$0xff]
    %v358 = vld [vmem:[%s4 + $0x28] sm:$0xff]
    %v359 = vld [vmem:[%s4 + $0x30] sm:$0xff]
    %v360 = vld [vmem:[%s4 + $0x38] sm:$0xff]
    %v361 = vld [vmem:[#allocation5] sm:$0x3]
    %v363 = vperm.slane %v361, 0
    %v364 = vperm.slane %v361, 1
    %v375 = vunpack.c.l.b16 %v353
    %v376 = vunpack.c.h.b16 %v353
    %v377 = vunpack.c.l.b16 %v354
    %v378 = vunpack.c.h.b16 %v354
    %v379 = vunpack.c.l.b16 %v355
    %v380 = vunpack.c.h.b16 %v355
    %v381 = vunpack.c.l.b16 %v356
    %v382 = vunpack.c.h.b16 %v356
    %v383 = vunpack.c.l.b16 %v357
    %v384 = vunpack.c.h.b16 %v357
    %v385 = vunpack.c.l.b16 %v358
    %v386 = vunpack.c.h.b16 %v358
    %v387 = vunpack.c.l.b16 %v359
    %v388 = vunpack.c.h.b16 %v359
    %v389 = vunpack.c.l.b16 %v360
    %v390 = vunpack.c.h.b16 %v360
    %v391 = vpack.c.b16 %v377, %v375
    %v392 = vpack.c.b16 %v378, %v376
    %v393 = vpack.c.b16 %v381, %v379
    %v394 = vpack.c.b16 %v382, %v380
    %v395 = vpack.c.b16 %v385, %v383
    %v396 = vpack.c.b16 %v386, %v384
    %v397 = vpack.c.b16 %v389, %v387
    %v398 = vpack.c.b16 %v390, %v388
    %v408 = vsel %vm241, %v351, 0
    %v411 = vsel %vm241, %v352, 0
    %413 = vmatpush.bf16.msra.mxu0 0
    %414 = vmatpush.bf16.msra.mxu0 0
    %415 = vmatpush.bf16.msra.mxu0 0
    %416 = vmatpush.bf16.msra.mxu0 0
    %417 = vmatpush.bf16.msra.mxu0 %v397
    %418 = vmatpush.bf16.msra.mxu0 %v395
    %419 = vmatpush.bf16.msra.mxu0 %v393
    %420 = vmatpush.bf16.msra.mxu0 %v391
    %421 = vmatmul.bf16.gmra.mxu0 %v408
    %v422 = vpop.f32.mrf.mxu0
    %v423 = vadd.f32 %v363, %v422
    %v424 = vpop.f32.mrf.mxu0
    %v425 = vadd.f32 %v363, %v424
    %426 = vmatmul.bf16.gmra.mxu0 %v411
    %v427 = vpop.f32.mrf.mxu0
    %v428 = vadd.f32 %v363, %v427
    %v429 = vpop.f32.mrf.mxu0
    %v430 = vadd.f32 %v363, %v429
    %431 = vdwg.mxu0
    %432 = vmatpush.bf16.msra.mxu0 0
    %433 = vmatpush.bf16.msra.mxu0 0
    %434 = vmatpush.bf16.msra.mxu0 0
    %435 = vmatpush.bf16.msra.mxu0 0
    %436 = vmatpush.bf16.msra.mxu0 %v398
    %437 = vmatpush.bf16.msra.mxu0 %v396
    %438 = vmatpush.bf16.msra.mxu0 %v394
    %439 = vmatpush.bf16.msra.mxu0 %v392
    %440 = vmatmul.bf16.gmra.mxu0 %v408
    %v441 = vpop.f32.mrf.mxu0
    %v442 = vadd.f32 %v364, %v441
    %v443 = vpop.f32.mrf.mxu0
    %v444 = vadd.f32 %v364, %v443
    %445 = vmatmul.bf16.gmra.mxu0 %v411
    %v446 = vpop.f32.mrf.mxu0
    %v447 = vadd.f32 %v364, %v446
    %v448 = vpop.f32.mrf.mxu0
    %v449 = vadd.f32 %v364, %v448
    %450 = vdwg.mxu0
    %v451 = vld [vmem:[%s1] sm:$0xff]
    %v452 = vld [vmem:[%s1 + $0x8] sm:$0xff]
    %v453 = vld [vmem:[%s1 + $0x10] sm:$0xff]
    %v454 = vld [vmem:[%s1 + $0x18] sm:$0xff]
    %v455 = vpack.c.bf16 %v425, %v423
    %v456 = vpack.c.bf16 %v430, %v428
    %v457 = vpack.c.bf16 %v444, %v442
    %v458 = vpack.c.bf16 %v449, %v447
    %461 = vrot.lane.b32.xlu0 %v455, 64
    %v462 = vpop.permute.xlu0 %461
    %463 = vrot.lane.b32.xlu0 %v456, 64
    %v464 = vpop.permute.xlu0 %463
    %vm465 = vcmask 261120
    %v467 = vsel %vm465, %v455, 0
    %v470 = vsel %vm465, %v456, 0
    %v473 = vsel %vm465, %v462, 0
    %v476 = vsel %vm465, %v464, 0
    %478 = vmatpush.bf16.xpose.msra.mxu0 0
    %479 = vmatpush.bf16.xpose.msra.mxu0 0
    %480 = vmatpush.bf16.xpose.msra.mxu0 0
    %481 = vmatpush.bf16.xpose.msra.mxu0 0
    %482 = vmatpush.bf16.xpose.msra.mxu0 0
    %483 = vmatpush.bf16.xpose.msra.mxu0 0
    %484 = vmatpush.bf16.xpose.msra.mxu0 %v476
    %485 = vmatpush.bf16.xpose.msra.mxu0 %v473
    %486 = vmatmul.bf16.gmra.mxu0 %v467
    %v487 = vpop.f32.mrf.mxu0
    %v488 = vadd.f32 0.0, %v487
    %v489 = vpop.f32.mrf.mxu0
    %v490 = vadd.f32 0.0, %v489
    %491 = vmatmul.bf16.gmra.mxu0 %v470
    %v492 = vpop.f32.mrf.mxu0
    %v493 = vadd.f32 0.0, %v492
    %v494 = vpop.f32.mrf.mxu0
    %v495 = vadd.f32 0.0, %v494
    %496 = vdwg.mxu0
    %v497 = vmul.f32 %v488, 0.17677669
    %v498 = vmul.f32 %v490, 0.17677669
    %v499 = vmul.f32 %v493, 0.17677669
    %v500 = vmul.f32 %v495, 0.17677669
    %v501 = vadd.f32 %v497, %v451
    %v502 = vadd.f32 %v498, %v452
    %v503 = vadd.f32 %v499, %v453
    %v504 = vadd.f32 %v500, %v454
    %v505 = vsel %vm465, %v501, -inf
    %506 = vmax.xlane.f32.xlu0 %v505
    %v507 = vpop.xlane.xlu0 %506
    %v508 = vsel %vm465, %v502, -inf
    %509 = vmax.xlane.f32.xlu0 %v508
    %v510 = vpop.xlane.xlu0 %509
    %v511 = vsel %vm465, %v503, -inf
    %512 = vmax.xlane.f32.xlu0 %v511
    %v513 = vpop.xlane.xlu0 %512
    %v514 = vsel %vm465, %v504, -inf
    %515 = vmax.xlane.f32.xlu0 %v514
    %v516 = vpop.xlane.xlu0 %515
    %v517 = vsub.f32 %v501, %v507
    %v518 = vsub.f32 %v502, %v510
    %v519 = vsub.f32 %v503, %v513
    %v520 = vsub.f32 %v504, %v516
    %v521 = vmul.f32 %v517, 1.442695
    %v522 = vpow.pop %v521
    %v523 = vmul.f32 %v518, 1.442695
    %v524 = vpow.pop %v523
    %v525 = vmul.f32 %v519, 1.442695
    %v526 = vpow.pop %v525
    %v527 = vmul.f32 %v520, 1.442695
    %v528 = vpow.pop %v527
    %v529 = vsel %vm465, %v522, 0.0
    %530 = vadd.xlane.f32.xlu0 %v529
    %v531 = vpop.xlane.xlu0 %530
    %v532 = vsel %vm465, %v524, 0.0
    %533 = vadd.xlane.f32.xlu0 %v532
    %v534 = vpop.xlane.xlu0 %533
    %v535 = vsel %vm465, %v526, 0.0
    %536 = vadd.xlane.f32.xlu0 %v535
    %v537 = vpop.xlane.xlu0 %536
    %v538 = vsel %vm465, %v528, 0.0
    %539 = vadd.xlane.f32.xlu0 %v538
    %v540 = vpop.xlane.xlu0 %539
    %v541 = vrcp.pop %v531
    %v542 = vrcp.pop %v534
    %v543 = vrcp.pop %v537
    %v544 = vrcp.pop %v540
    %v545 = vmul.f32 %v522, %v541
    %v546 = vmul.f32 %v524, %v542
    %v547 = vmul.f32 %v526, %v543
    %v548 = vmul.f32 %v528, %v544
    %v549 = vpack.c.bf16 %v546, %v545
    %v550 = vpack.c.bf16 %v548, %v547
    %v552 = vsel %vm465, %v549, 0
    %v555 = vsel %vm465, %v550, 0
    %557 = vmatpush.bf16.msra.mxu0 0
    %558 = vmatpush.bf16.msra.mxu0 0
    %559 = vmatpush.bf16.msra.mxu0 0
    %560 = vmatpush.bf16.msra.mxu0 0
    %561 = vmatpush.bf16.msra.mxu0 0
    %562 = vmatpush.bf16.msra.mxu0 0
    %563 = vmatpush.bf16.msra.mxu0 %v458
    %564 = vmatpush.bf16.msra.mxu0 %v457
    %565 = vmatmul.bf16.gmra.mxu0 %v552
    %v566 = vpop.f32.mrf.mxu0
    %v567 = vadd.f32 0.0, %v566
    %v568 = vpop.f32.mrf.mxu0
    %v569 = vadd.f32 0.0, %v568
    %570 = vmatmul.bf16.gmra.mxu0 %v555
    %v571 = vpop.f32.mrf.mxu0
    %v572 = vadd.f32 0.0, %v571
    %v573 = vpop.f32.mrf.mxu0
    %v574 = vadd.f32 0.0, %v573
    %575 = vdwg.mxu0
    %576 = vrot.lane.b32.xlu0 %v455, 96
    %v577 = vpop.permute.xlu0 %576
    %578 = vrot.lane.b32.xlu0 %v456, 96
    %v579 = vpop.permute.xlu0 %578
    %580 = vrot.lane.b32.xlu0 %v455, 32
    %v581 = vpop.permute.xlu0 %580
    %582 = vrot.lane.b32.xlu0 %v456, 32
    %v583 = vpop.permute.xlu0 %582
    %v585 = vsel %vm465, %v577, 0
    %v588 = vsel %vm465, %v579, 0
    %v591 = vsel %vm465, %v581, 0
    %v594 = vsel %vm465, %v583, 0
    %596 = vmatpush.bf16.xpose.msra.mxu0 0
    %597 = vmatpush.bf16.xpose.msra.mxu0 0
    %598 = vmatpush.bf16.xpose.msra.mxu0 0
    %599 = vmatpush.bf16.xpose.msra.mxu0 0
    %600 = vmatpush.bf16.xpose.msra.mxu0 0
    %601 = vmatpush.bf16.xpose.msra.mxu0 0
    %602 = vmatpush.bf16.xpose.msra.mxu0 %v594
    %603 = vmatpush.bf16.xpose.msra.mxu0 %v591
    %604 = vmatmul.bf16.gmra.mxu0 %v585
    %v605 = vpop.f32.mrf.mxu0
    %v606 = vadd.f32 0.0, %v605
    %v607 = vpop.f32.mrf.mxu0
    %v608 = vadd.f32 0.0, %v607
    %609 = vmatmul.bf16.gmra.mxu0 %v588
    %v610 = vpop.f32.mrf.mxu0
    %v611 = vadd.f32 0.0, %v610
    %v612 = vpop.f32.mrf.mxu0
    %v613 = vadd.f32 0.0, %v612
    %614 = vdwg.mxu0
    %v615 = vmul.f32 %v606, 0.17677669
    %v616 = vmul.f32 %v608, 0.17677669
    %v617 = vmul.f32 %v611, 0.17677669
    %v618 = vmul.f32 %v613, 0.17677669
    %v619 = vadd.f32 %v615, %v451
    %v620 = vadd.f32 %v616, %v452
    %v621 = vadd.f32 %v617, %v453
    %v622 = vadd.f32 %v618, %v454
    %v623 = vsel %vm465, %v619, -inf
    %624 = vmax.xlane.f32.xlu0 %v623
    %v625 = vpop.xlane.xlu0 %624
    %v626 = vsel %vm465, %v620, -inf
    %627 = vmax.xlane.f32.xlu0 %v626
    %v628 = vpop.xlane.xlu0 %627
    %v629 = vsel %vm465, %v621, -inf
    %630 = vmax.xlane.f32.xlu0 %v629
    %v631 = vpop.xlane.xlu0 %630
    %v632 = vsel %vm465, %v622, -inf
    %633 = vmax.xlane.f32.xlu0 %v632
    %v634 = vpop.xlane.xlu0 %633
    %v635 = vsub.f32 %v619, %v625
    %v636 = vsub.f32 %v620, %v628
    %v637 = vsub.f32 %v621, %v631
    %v638 = vsub.f32 %v622, %v634
    %v639 = vmul.f32 %v635, 1.442695
    %v640 = vpow.pop %v639
    %v641 = vmul.f32 %v636, 1.442695
    %v642 = vpow.pop %v641
    %v643 = vmul.f32 %v637, 1.442695
    %v644 = vpow.pop %v643
    %v645 = vmul.f32 %v638, 1.442695
    %v646 = vpow.pop %v645
    %v647 = vsel %vm465, %v640, 0.0
    %648 = vadd.xlane.f32.xlu0 %v647
    %v649 = vpop.xlane.xlu0 %648
    %v650 = vsel %vm465, %v642, 0.0
    %651 = vadd.xlane.f32.xlu0 %v650
    %v652 = vpop.xlane.xlu0 %651
    %v653 = vsel %vm465, %v644, 0.0
    %654 = vadd.xlane.f32.xlu0 %v653
    %v655 = vpop.xlane.xlu0 %654
    %v656 = vsel %vm465, %v646, 0.0
    %657 = vadd.xlane.f32.xlu0 %v656
    %v658 = vpop.xlane.xlu0 %657
    %v659 = vrcp.pop %v649
    %v660 = vrcp.pop %v652
    %v661 = vrcp.pop %v655
    %v662 = vrcp.pop %v658
    %v663 = vmul.f32 %v640, %v659
    %v664 = vmul.f32 %v642, %v660
    %v665 = vmul.f32 %v644, %v661
    %v666 = vmul.f32 %v646, %v662
    %v667 = vpack.c.bf16 %v664, %v663
    %v668 = vpack.c.bf16 %v666, %v665
    %671 = vrot.lane.b32.xlu0 %v457, 96
    %v672 = vpop.permute.xlu0 %671
    %673 = vrot.lane.b32.xlu0 %v458, 96
    %v674 = vpop.permute.xlu0 %673
    %v678 = vsel %vm465, %v667, 0
    %v681 = vsel %vm465, %v668, 0
    %683 = vmatpush.bf16.msra.mxu0 0
    %684 = vmatpush.bf16.msra.mxu0 0
    %685 = vmatpush.bf16.msra.mxu0 0
    %686 = vmatpush.bf16.msra.mxu0 0
    %687 = vmatpush.bf16.msra.mxu0 0
    %688 = vmatpush.bf16.msra.mxu0 0
    %689 = vmatpush.bf16.msra.mxu0 %v674
    %690 = vmatpush.bf16.msra.mxu0 %v672
    %691 = vmatmul.bf16.gmra.mxu0 %v678
    %v692 = vpop.f32.mrf.mxu0
    %v693 = vadd.f32 0.0, %v692
    %v694 = vpop.f32.mrf.mxu0
    %v695 = vadd.f32 0.0, %v694
    %696 = vmatmul.bf16.gmra.mxu0 %v681
    %v697 = vpop.f32.mrf.mxu0
    %v698 = vadd.f32 0.0, %v697
    %v699 = vpop.f32.mrf.mxu0
    %v700 = vadd.f32 0.0, %v699
    %701 = vdwg.mxu0
    %706 = vrot.lane.b32.xlu0 %v693, 32
    %v707 = vpop.permute.xlu0 %706
    %708 = vrot.lane.b32.xlu0 %v695, 32
    %v709 = vpop.permute.xlu0 %708
    %710 = vrot.lane.b32.xlu0 %v698, 32
    %v711 = vpop.permute.xlu0 %710
    %712 = vrot.lane.b32.xlu0 %v700, 32
    %v713 = vpop.permute.xlu0 %712
    %v718 = vsel %vm465, %v567, %v707
    %v719 = vsel %vm465, %v569, %v709
    %v720 = vsel %vm465, %v572, %v711
    %v721 = vsel %vm465, %v574, %v713
    %v722 = vpack.c.bf16 %v719, %v718
    %v723 = vpack.c.bf16 %v721, %v720
    %v724 = vld [vmem:[%s6] sm:$0xf]
    %v725 = vld [vmem:[%s6 + $0x4] sm:$0xf]
    %v726 = vld [vmem:[%s6 + $0x8] sm:$0xf]
    %v727 = vld [vmem:[%s6 + $0xc] sm:$0xf]
    %v728 = vld [vmem:[%s6 + $0x10] sm:$0xf]
    %v729 = vld [vmem:[%s6 + $0x14] sm:$0xf]
    %v730 = vld [vmem:[%s6 + $0x18] sm:$0xf]
    %v731 = vld [vmem:[%s6 + $0x1c] sm:$0xf]
    %v732 = vld [vmem:[#allocation7] sm:$0x1]
    %v734 = vperm.slane %v732, 0
    %v744 = vunpack.c.l.b16 %v724
    %v745 = vunpack.c.l.b16 %v725
    %v746 = vunpack.c.l.b16 %v726
    %v747 = vunpack.c.l.b16 %v727
    %v748 = vunpack.c.l.b16 %v728
    %v749 = vunpack.c.l.b16 %v729
    %v750 = vunpack.c.l.b16 %v730
    %v751 = vunpack.c.l.b16 %v731
    %v752 = vpack.c.b16 %v745, %v744
    %v753 = vpack.c.b16 %v747, %v746
    %v754 = vpack.c.b16 %v749, %v748
    %v755 = vpack.c.b16 %v751, %v750
    %v761 = vsel %vm241, %v722, 0
    %v764 = vsel %vm241, %v723, 0
    %766 = vmatpush.bf16.msra.mxu0 0
    %767 = vmatpush.bf16.msra.mxu0 0
    %768 = vmatpush.bf16.msra.mxu0 0
    %769 = vmatpush.bf16.msra.mxu0 0
    %770 = vmatpush.bf16.msra.mxu0 %v755
    %771 = vmatpush.bf16.msra.mxu0 %v754
    %772 = vmatpush.bf16.msra.mxu0 %v753
    %773 = vmatpush.bf16.msra.mxu0 %v752
    %774 = vmatmul.bf16.gmra.mxu0 %v761
    %v775 = vpop.f32.mrf.mxu0
    %v776 = vadd.f32 %v734, %v775
    %v777 = vpop.f32.mrf.mxu0
    %v778 = vadd.f32 %v734, %v777
    %779 = vmatmul.bf16.gmra.mxu0 %v764
    %v780 = vpop.f32.mrf.mxu0
    %v781 = vadd.f32 %v734, %v780
    %v782 = vpop.f32.mrf.mxu0
    %v783 = vadd.f32 %v734, %v782
    %784 = vdwg.mxu0
    %v785 = vadd.f32 %v347, %v776
    %v786 = vadd.f32 %v348, %v778
    %v787 = vadd.f32 %v349, %v781
    %v788 = vadd.f32 %v350, %v783
    %v789 = vld [vmem:[#allocation8] sm:$0x1]
    %v790 = vld [vmem:[#allocation10] sm:$0x1]
    %v791 = vsel %vm241, %v785, 0.0
    %792 = vadd.xlane.f32.xlu0 %v791
    %v793 = vpop.xlane.xlu0 %792
    %v794 = vsel %vm241, %v786, 0.0
    %795 = vadd.xlane.f32.xlu0 %v794
    %v796 = vpop.xlane.xlu0 %795
    %v797 = vsel %vm241, %v787, 0.0
    %798 = vadd.xlane.f32.xlu0 %v797
    %v799 = vpop.xlane.xlu0 %798
    %v800 = vsel %vm241, %v788, 0.0
    %801 = vadd.xlane.f32.xlu0 %v800
    %v802 = vpop.xlane.xlu0 %801
    %v803 = vmul.f32 %v793, %v260
    %v804 = vmul.f32 %v796, %v260
    %v805 = vmul.f32 %v799, %v260
    %v806 = vmul.f32 %v802, %v260
    %v807 = vsub.f32 %v785, %v803
    %v808 = vsub.f32 %v786, %v804
    %v809 = vsub.f32 %v787, %v805
    %v810 = vsub.f32 %v788, %v806
    %v811 = vmul.f32 %v807, %v807
    %v812 = vmul.f32 %v808, %v808
    %v813 = vmul.f32 %v809, %v809
    %v814 = vmul.f32 %v810, %v810
    %v815 = vsel %vm241, %v811, 0.0
    %816 = vadd.xlane.f32.xlu0 %v815
    %v817 = vpop.xlane.xlu0 %816
    %v818 = vsel %vm241, %v812, 0.0
    %819 = vadd.xlane.f32.xlu0 %v818
    %v820 = vpop.xlane.xlu0 %819
    %v821 = vsel %vm241, %v813, 0.0
    %822 = vadd.xlane.f32.xlu0 %v821
    %v823 = vpop.xlane.xlu0 %822
    %v824 = vsel %vm241, %v814, 0.0
    %825 = vadd.xlane.f32.xlu0 %v824
    %v826 = vpop.xlane.xlu0 %825
    %v827 = vmul.f32 %v817, %v260
    %v828 = vmul.f32 %v820, %v260
    %v829 = vmul.f32 %v823, %v260
    %v830 = vmul.f32 %v826, %v260
    %v831 = vadd.f32 %v827, 1e-12
    %v832 = vadd.f32 %v828, 1e-12
    %v833 = vadd.f32 %v829, 1e-12
    %v834 = vadd.f32 %v830, 1e-12
    %v835 = vrsqrt.pop %v831
    %v836 = vmul.f32 %v835, %v831
    %v837 = vmul.f32 %v836, %v835
    %v838 = vmul.f32 0.5, %v837
    %v839 = vsub.f32 1.5, %v838
    %v840 = vmul.f32 %v835, %v839
    %vm841 = vweird.f32 %v831
    %vm842 = vweird.f32 %v835
    %vm843 = vmor %vm841, %vm842
    %v844 = vsel %vm843, %v835, %v840
    %v845 = vrsqrt.pop %v832
    %v846 = vmul.f32 %v845, %v832
    %v847 = vmul.f32 %v846, %v845
    %v848 = vmul.f32 0.5, %v847
    %v849 = vsub.f32 1.5, %v848
    %v850 = vmul.f32 %v845, %v849
    %vm851 = vweird.f32 %v832
    %vm852 = vweird.f32 %v845
    %vm853 = vmor %vm851, %vm852
    %v854 = vsel %vm853, %v845, %v850
    %v855 = vrsqrt.pop %v833
    %v856 = vmul.f32 %v855, %v833
    %v857 = vmul.f32 %v856, %v855
    %v858 = vmul.f32 0.5, %v857
    %v859 = vsub.f32 1.5, %v858
    %v860 = vmul.f32 %v855, %v859
    %vm861 = vweird.f32 %v833
    %vm862 = vweird.f32 %v855
    %vm863 = vmor %vm861, %vm862
    %v864 = vsel %vm863, %v855, %v860
    %v865 = vrsqrt.pop %v834
    %v866 = vmul.f32 %v865, %v834
    %v867 = vmul.f32 %v866, %v865
    %v868 = vmul.f32 0.5, %v867
    %v869 = vsub.f32 1.5, %v868
    %v870 = vmul.f32 %v865, %v869
    %vm871 = vweird.f32 %v834
    %vm872 = vweird.f32 %v865
    %vm873 = vmor %vm871, %vm872
    %v874 = vsel %vm873, %v865, %v870
    %v875 = vmul.f32 %v807, %v844
    %v876 = vmul.f32 %v808, %v854
    %v877 = vmul.f32 %v809, %v864
    %v878 = vmul.f32 %v810, %v874
    %v880 = vperm.slane %v789, 0
    %v882 = vmul.f32 %v875, %v880
    %v883 = vmul.f32 %v876, %v880
    %v884 = vmul.f32 %v877, %v880
    %v885 = vmul.f32 %v878, %v880
    %v887 = vperm.slane %v790, 0
    %v889 = vadd.f32 %v882, %v887
    %v890 = vadd.f32 %v883, %v887
    %v891 = vadd.f32 %v884, %v887
    %v892 = vadd.f32 %v885, %v887
    %v893 = vpack.c.bf16 %v890, %v889
    %v894 = vpack.c.bf16 %v892, %v891
    %v895 = vld [vmem:[%s10] sm:$0xf]
    %v896 = vld [vmem:[%s10 + $0x4] sm:$0xf]
    %v897 = vld [vmem:[%s10 + $0x8] sm:$0xf]
    %v898 = vld [vmem:[%s10 + $0xc] sm:$0xf]
    %v899 = vld [vmem:[%s10 + $0x10] sm:$0xf]
    %v900 = vld [vmem:[%s10 + $0x14] sm:$0xf]
    %v901 = vld [vmem:[%s10 + $0x18] sm:$0xf]
    %v902 = vld [vmem:[%s10 + $0x1c] sm:$0xf]
    %v903 = vld [vmem:[#allocation11] sm:$0x1]
    %v905 = vperm.slane %v903, 0
    %v915 = vunpack.c.l.b16 %v895
    %v916 = vunpack.c.l.b16 %v896
    %v917 = vunpack.c.l.b16 %v897
    %v918 = vunpack.c.l.b16 %v898
    %v919 = vunpack.c.l.b16 %v899
    %v920 = vunpack.c.l.b16 %v900
    %v921 = vunpack.c.l.b16 %v901
    %v922 = vunpack.c.l.b16 %v902
    %v923 = vpack.c.b16 %v916, %v915
    %v924 = vpack.c.b16 %v918, %v917
    %v925 = vpack.c.b16 %v920, %v919
    %v926 = vpack.c.b16 %v922, %v921
    %v932 = vsel %vm241, %v893, 0
    %v935 = vsel %vm241, %v894, 0
    %937 = vmatpush.bf16.msra.mxu0 0
    %938 = vmatpush.bf16.msra.mxu0 0
    %939 = vmatpush.bf16.msra.mxu0 0
    %940 = vmatpush.bf16.msra.mxu0 0
    %941 = vmatpush.bf16.msra.mxu0 %v926
    %942 = vmatpush.bf16.msra.mxu0 %v925
    %943 = vmatpush.bf16.msra.mxu0 %v924
    %944 = vmatpush.bf16.msra.mxu0 %v923
    %945 = vmatmul.bf16.gmra.mxu0 %v932
    %v946 = vpop.f32.mrf.mxu0
    %v947 = vadd.f32 %v905, %v946
    %v948 = vpop.f32.mrf.mxu0
    %v949 = vadd.f32 %v905, %v948
    %950 = vmatmul.bf16.gmra.mxu0 %v935
    %v951 = vpop.f32.mrf.mxu0
    %v952 = vadd.f32 %v905, %v951
    %v953 = vpop.f32.mrf.mxu0
    %v954 = vadd.f32 %v905, %v953
    %955 = vdwg.mxu0
    %v956 = vmul.f32 %v947, %v947
    %v957 = vmul.f32 %v949, %v949
    %v958 = vmul.f32 %v952, %v952
    %v959 = vmul.f32 %v954, %v954
    %v960 = vmul.f32 %v947, %v956
    %v961 = vmul.f32 %v949, %v957
    %v962 = vmul.f32 %v952, %v958
    %v963 = vmul.f32 %v954, %v959
    %v964 = vmul.f32 %v960, 0.044715
    %v965 = vmul.f32 %v961, 0.044715
    %v966 = vmul.f32 %v962, 0.044715
    %v967 = vmul.f32 %v963, 0.044715
    %v968 = vadd.f32 %v947, %v964
    %v969 = vadd.f32 %v949, %v965
    %v970 = vadd.f32 %v952, %v966
    %v971 = vadd.f32 %v954, %v967
    %v972 = vmul.f32 %v968, 0.7978846
    %v973 = vmul.f32 %v969, 0.7978846
    %v974 = vmul.f32 %v970, 0.7978846
    %v975 = vmul.f32 %v971, 0.7978846
    %v976 = vtanh.pop %v972
    %v977 = vtanh.pop %v973
    %v978 = vtanh.pop %v974
    %v979 = vtanh.pop %v975
    %v980 = vadd.f32 %v976, 1.0
    %v981 = vadd.f32 %v977, 1.0
    %v982 = vadd.f32 %v978, 1.0
    %v983 = vadd.f32 %v979, 1.0
    %v984 = vmul.f32 %v980, 0.5
    %v985 = vmul.f32 %v981, 0.5
    %v986 = vmul.f32 %v982, 0.5
    %v987 = vmul.f32 %v983, 0.5
    %v988 = vmul.f32 %v947, %v984
    %v989 = vmul.f32 %v949, %v985
    %v990 = vmul.f32 %v952, %v986
    %v991 = vmul.f32 %v954, %v987
    %v992 = vpack.c.bf16 %v989, %v988
    %v993 = vpack.c.bf16 %v991, %v990
    %v994 = vld [vmem:[%s12] sm:$0xf]
    %v995 = vld [vmem:[%s12 + $0x4] sm:$0xf]
    %v996 = vld [vmem:[%s12 + $0x8] sm:$0xf]
    %v997 = vld [vmem:[%s12 + $0xc] sm:$0xf]
    %v998 = vld [vmem:[%s12 + $0x10] sm:$0xf]
    %v999 = vld [vmem:[%s12 + $0x14] sm:$0xf]
    %v1000 = vld [vmem:[%s12 + $0x18] sm:$0xf]
    %v1001 = vld [vmem:[%s12 + $0x1c] sm:$0xf]
    %v1002 = vld [vmem:[%s12 + $0x20] sm:$0xf]
    %v1003 = vld [vmem:[%s12 + $0x24] sm:$0xf]
    %v1004 = vld [vmem:[%s12 + $0x28] sm:$0xf]
    %v1005 = vld [vmem:[%s12 + $0x2c] sm:$0xf]
    %v1006 = vld [vmem:[%s12 + $0x30] sm:$0xf]
    %v1007 = vld [vmem:[%s12 + $0x34] sm:$0xf]
    %v1008 = vld [vmem:[%s12 + $0x38] sm:$0xf]
    %v1009 = vld [vmem:[%s12 + $0x3c] sm:$0xf]
    %v1010 = vld [vmem:[#allocation13] sm:$0x1]
    %v1012 = vperm.slane %v1010, 0
    %v1030 = vunpack.c.l.b16 %v994
    %v1031 = vunpack.c.l.b16 %v995
    %v1032 = vunpack.c.l.b16 %v996
    %v1033 = vunpack.c.l.b16 %v997
    %v1034 = vunpack.c.l.b16 %v998
    %v1035 = vunpack.c.l.b16 %v999
    %v1036 = vunpack.c.l.b16 %v1000
    %v1037 = vunpack.c.l.b16 %v1001
    %v1038 = vunpack.c.l.b16 %v1002
    %v1039 = vunpack.c.l.b16 %v1003
    %v1040 = vunpack.c.l.b16 %v1004
    %v1041 = vunpack.c.l.b16 %v1005
    %v1042 = vunpack.c.l.b16 %v1006
    %v1043 = vunpack.c.l.b16 %v1007
    %v1044 = vunpack.c.l.b16 %v1008
    %v1045 = vunpack.c.l.b16 %v1009
    %v1046 = vpack.c.b16 %v1031, %v1030
    %v1047 = vpack.c.b16 %v1033, %v1032
    %v1048 = vpack.c.b16 %v1035, %v1034
    %v1049 = vpack.c.b16 %v1037, %v1036
    %v1050 = vpack.c.b16 %v1039, %v1038
    %v1051 = vpack.c.b16 %v1041, %v1040
    %v1052 = vpack.c.b16 %v1043, %v1042
    %v1053 = vpack.c.b16 %v1045, %v1044
    %1062 = vmatpush.bf16.msra.mxu0 %v1053
    %1063 = vmatpush.bf16.msra.mxu0 %v1052
    %1064 = vmatpush.bf16.msra.mxu0 %v1051
    %1065 = vmatpush.bf16.msra.mxu0 %v1050
    %1066 = vmatpush.bf16.msra.mxu0 %v1049
    %1067 = vmatpush.bf16.msra.mxu0 %v1048
    %1068 = vmatpush.bf16.msra.mxu0 %v1047
    %1069 = vmatpush.bf16.msra.mxu0 %v1046
    %1070 = vmatmul.bf16.gmra.mxu0 %v992
    %v1071 = vpop.f32.mrf.mxu0
    %v1072 = vadd.f32 %v1012, %v1071
    %v1073 = vpop.f32.mrf.mxu0
    %v1074 = vadd.f32 %v1012, %v1073
    %1075 = vmatmul.bf16.gmra.mxu0 %v993
    %v1076 = vpop.f32.mrf.mxu0
    %v1077 = vadd.f32 %v1012, %v1076
    %v1078 = vpop.f32.mrf.mxu0
    %v1079 = vadd.f32 %v1012, %v1078
    %1080 = vdwg.mxu0
    %v1081 = vadd.f32 %v889, %v1072
    %v1082 = vadd.f32 %v890, %v1074
    %v1083 = vadd.f32 %v891, %v1077
    %v1084 = vadd.f32 %v892, %v1079
    %v1085 = vld [vmem:[#allocation14] sm:$0x1]
    %v1086 = vld [vmem:[#allocation16] sm:$0x1]
    %v1087 = vsel %vm241, %v1081, 0.0
    %1088 = vadd.xlane.f32.xlu0 %v1087
    %v1089 = vpop.xlane.xlu0 %1088
    %v1090 = vsel %vm241, %v1082, 0.0
    %1091 = vadd.xlane.f32.xlu0 %v1090
    %v1092 = vpop.xlane.xlu0 %1091
    %v1093 = vsel %vm241, %v1083, 0.0
    %1094 = vadd.xlane.f32.xlu0 %v1093
    %v1095 = vpop.xlane.xlu0 %1094
    %v1096 = vsel %vm241, %v1084, 0.0
    %1097 = vadd.xlane.f32.xlu0 %v1096
    %v1098 = vpop.xlane.xlu0 %1097
    %v1099 = vmul.f32 %v1089, %v260
    %v1100 = vmul.f32 %v1092, %v260
    %v1101 = vmul.f32 %v1095, %v260
    %v1102 = vmul.f32 %v1098, %v260
    %v1103 = vsub.f32 %v1081, %v1099
    %v1104 = vsub.f32 %v1082, %v1100
    %v1105 = vsub.f32 %v1083, %v1101
    %v1106 = vsub.f32 %v1084, %v1102
    %v1107 = vmul.f32 %v1103, %v1103
    %v1108 = vmul.f32 %v1104, %v1104
    %v1109 = vmul.f32 %v1105, %v1105
    %v1110 = vmul.f32 %v1106, %v1106
    %v1111 = vsel %vm241, %v1107, 0.0
    %1112 = vadd.xlane.f32.xlu0 %v1111
    %v1113 = vpop.xlane.xlu0 %1112
    %v1114 = vsel %vm241, %v1108, 0.0
    %1115 = vadd.xlane.f32.xlu0 %v1114
    %v1116 = vpop.xlane.xlu0 %1115
    %v1117 = vsel %vm241, %v1109, 0.0
    %1118 = vadd.xlane.f32.xlu0 %v1117
    %v1119 = vpop.xlane.xlu0 %1118
    %v1120 = vsel %vm241, %v1110, 0.0
    %1121 = vadd.xlane.f32.xlu0 %v1120
    %v1122 = vpop.xlane.xlu0 %1121
    %v1123 = vmul.f32 %v1113, %v260
    %v1124 = vmul.f32 %v1116, %v260
    %v1125 = vmul.f32 %v1119, %v260
    %v1126 = vmul.f32 %v1122, %v260
    %v1127 = vadd.f32 %v1123, 1e-12
    %v1128 = vadd.f32 %v1124, 1e-12
    %v1129 = vadd.f32 %v1125, 1e-12
    %v1130 = vadd.f32 %v1126, 1e-12
    %v1131 = vrsqrt.pop %v1127
    %v1132 = vmul.f32 %v1131, %v1127
    %v1133 = vmul.f32 %v1132, %v1131
    %v1134 = vmul.f32 0.5, %v1133
    %v1135 = vsub.f32 1.5, %v1134
    %v1136 = vmul.f32 %v1131, %v1135
    %vm1137 = vweird.f32 %v1127
    %vm1138 = vweird.f32 %v1131
    %vm1139 = vmor %vm1137, %vm1138
    %v1140 = vsel %vm1139, %v1131, %v1136
    %v1141 = vrsqrt.pop %v1128
    %v1142 = vmul.f32 %v1141, %v1128
    %v1143 = vmul.f32 %v1142, %v1141
    %v1144 = vmul.f32 0.5, %v1143
    %v1145 = vsub.f32 1.5, %v1144
    %v1146 = vmul.f32 %v1141, %v1145
    %vm1147 = vweird.f32 %v1128
    %vm1148 = vweird.f32 %v1141
    %vm1149 = vmor %vm1147, %vm1148
    %v1150 = vsel %vm1149, %v1141, %v1146
    %v1151 = vrsqrt.pop %v1129
    %v1152 = vmul.f32 %v1151, %v1129
    %v1153 = vmul.f32 %v1152, %v1151
    %v1154 = vmul.f32 0.5, %v1153
    %v1155 = vsub.f32 1.5, %v1154
    %v1156 = vmul.f32 %v1151, %v1155
    %vm1157 = vweird.f32 %v1129
    %vm1158 = vweird.f32 %v1151
    %vm1159 = vmor %vm1157, %vm1158
    %v1160 = vsel %vm1159, %v1151, %v1156
    %v1161 = vrsqrt.pop %v1130
    %v1162 = vmul.f32 %v1161, %v1130
    %v1163 = vmul.f32 %v1162, %v1161
    %v1164 = vmul.f32 0.5, %v1163
    %v1165 = vsub.f32 1.5, %v1164
    %v1166 = vmul.f32 %v1161, %v1165
    %vm1167 = vweird.f32 %v1130
    %vm1168 = vweird.f32 %v1161
    %vm1169 = vmor %vm1167, %vm1168
    %v1170 = vsel %vm1169, %v1161, %v1166
    %v1171 = vmul.f32 %v1103, %v1140
    %v1172 = vmul.f32 %v1104, %v1150
    %v1173 = vmul.f32 %v1105, %v1160
    %v1174 = vmul.f32 %v1106, %v1170
    %v1176 = vperm.slane %v1085, 0
    %v1178 = vmul.f32 %v1171, %v1176
    %v1179 = vmul.f32 %v1172, %v1176
    %v1180 = vmul.f32 %v1173, %v1176
    %v1181 = vmul.f32 %v1174, %v1176
    %v1183 = vperm.slane %v1086, 0
    %v1185 = vadd.f32 %v1178, %v1183
    %v1186 = vadd.f32 %v1179, %v1183
    %v1187 = vadd.f32 %v1180, %v1183
    %v1188 = vadd.f32 %v1181, %v1183
    %v1189 = vpack.c.bf16 %v1185, %v1185
    %v1190 = vpack.c.bf16 %v1186, %v1186
    %v1191 = vpack.c.bf16 %v1187, %v1187
    %v1192 = vpack.c.bf16 %v1188, %v1188
    %v1193 = vld [vmem:[#allocation17] sm:$0xf]
    %v1194 = vld [vmem:[#allocation17 + $0x4] sm:$0xf]
    %v1195 = vld [vmem:[#allocation17 + $0x8] sm:$0xf]
    %v1196 = vld [vmem:[#allocation17 + $0xc] sm:$0xf]
    %v1197 = vld [vmem:[#allocation17 + $0x10] sm:$0xf]
    %v1198 = vld [vmem:[#allocation17 + $0x14] sm:$0xf]
    %v1199 = vld [vmem:[#allocation17 + $0x18] sm:$0xf]
    %v1200 = vld [vmem:[#allocation17 + $0x1c] sm:$0xf]
    %v1201 = vld [vmem:[#allocation19] sm:$0x1]
    %v1203 = vperm.slane %v1201, 0
    %v1209 = vunpack.c.l.b16 %v1189
    %v1210 = vunpack.c.l.b16 %v1190
    %v1211 = vunpack.c.l.b16 %v1191
    %v1212 = vunpack.c.l.b16 %v1192
    %v1213 = vrot.slane %v1210, 7
    %vm1214 = vcmask 1041409
    %v1215 = vsel %vm1214, %v1213, %v1209
    %v1216 = vrot.slane %v1211, 6
    %vm1217 = vcmask 1042434
    %v1218 = vsel %vm1217, %v1216, %v1215
    %v1219 = vrot.slane %v1212, 5
    %vm1220 = vcmask 1043459
    %v1221 = vsel %vm1220, %v1219, %v1218
    %v1222 = vpack.c.b16 %v1221, %v1221
    %v1231 = vunpack.c.l.b16 %v1193
    %v1232 = vunpack.c.l.b16 %v1194
    %v1233 = vunpack.c.l.b16 %v1195
    %v1234 = vunpack.c.l.b16 %v1196
    %v1235 = vunpack.c.l.b16 %v1197
    %v1236 = vunpack.c.l.b16 %v1198
    %v1237 = vunpack.c.l.b16 %v1199
    %v1238 = vunpack.c.l.b16 %v1200
    %v1239 = vpack.c.b16 %v1232, %v1231
    %v1240 = vpack.c.b16 %v1234, %v1233
    %v1241 = vpack.c.b16 %v1236, %v1235
    %v1242 = vpack.c.b16 %v1238, %v1237
    %v1248 = vsel %vm241, %v1222, 0
    %1250 = vmatpush.bf16.msra.mxu0 0
    %1251 = vmatpush.bf16.msra.mxu0 0
    %1252 = vmatpush.bf16.msra.mxu0 0
    %1253 = vmatpush.bf16.msra.mxu0 0
    %1254 = vmatpush.bf16.msra.mxu0 %v1242
    %1255 = vmatpush.bf16.msra.mxu0 %v1241
    %1256 = vmatpush.bf16.msra.mxu0 %v1240
    %1257 = vmatpush.bf16.msra.mxu0 %v1239
    %1258 = vmatmul.bf16.gmra.mxu0 %v1248
    %v1259 = vpop.f32.mrf.mxu0
    %v1260 = vadd.f32 %v1203, %v1259
    %v1261 = vpop.f32.mrf.mxu0
    %1262 = vdwg.mxu0
    %v1263 = vtanh.pop %v1260
    %v1264 = vpack.c.bf16 %v1263, %v1263
    %v1265 = vld [vmem:[%s18] sm:$0xf]
    %v1266 = vld [vmem:[%s18 + $0x4] sm:$0xf]
    %v1267 = vld [vmem:[%s18 + $0x8] sm:$0xf]
    %v1268 = vld [vmem:[%s18 + $0xc] sm:$0xf]
    %v1269 = vld [vmem:[%s18 + $0x10] sm:$0xf]
    %v1270 = vld [vmem:[%s18 + $0x14] sm:$0xf]
    %v1271 = vld [vmem:[%s18 + $0x18] sm:$0xf]
    %v1272 = vld [vmem:[%s18 + $0x1c] sm:$0xf]
    %v1273 = vld [vmem:[%s19] sm:$0xf]
    %v1274 = vld [vmem:[%s19 + $0x4] sm:$0xf]
    %v1275 = vld [vmem:[%s19 + $0x8] sm:$0xf]
    %v1276 = vld [vmem:[%s19 + $0xc] sm:$0xf]
    %v1277 = vld [vmem:[%s19 + $0x10] sm:$0xf]
    %v1278 = vld [vmem:[%s19 + $0x14] sm:$0xf]
    %v1279 = vld [vmem:[%s19 + $0x18] sm:$0xf]
    %v1280 = vld [vmem:[%s19 + $0x1c] sm:$0xf]
    %v1282 = vrot.slane %v1264, 1
    %v1291 = vunpack.c.l.b16 %v1273
    %v1292 = vunpack.c.l.b16 %v1274
    %v1293 = vunpack.c.l.b16 %v1275
    %v1294 = vunpack.c.l.b16 %v1276
    %v1295 = vunpack.c.l.b16 %v1277
    %v1296 = vunpack.c.l.b16 %v1278
    %v1297 = vunpack.c.l.b16 %v1279
    %v1298 = vunpack.c.l.b16 %v1280
    %v1299 = vpack.c.b16 %v1292, %v1291
    %v1300 = vpack.c.b16 %v1294, %v1293
    %v1301 = vpack.c.b16 %v1296, %v1295
    %v1302 = vpack.c.b16 %v1298, %v1297
    %v1308 = vsel %vm241, %v1282, 0
    %1310 = vmatpush.bf16.msra.mxu0 0
    %1311 = vmatpush.bf16.msra.mxu0 0
    %1312 = vmatpush.bf16.msra.mxu0 0
    %1313 = vmatpush.bf16.msra.mxu0 0
    %1314 = vmatpush.bf16.msra.mxu0 %v1302
    %1315 = vmatpush.bf16.msra.mxu0 %v1301
    %1316 = vmatpush.bf16.msra.mxu0 %v1300
    %1317 = vmatpush.bf16.msra.mxu0 %v1299
    %1318 = vmatmul.bf16.gmra.mxu0 %v1308
    %v1319 = vpop.f32.mrf.mxu0
    %v1320 = vadd.f32 0.0, %v1319
    %v1321 = vpop.f32.mrf.mxu0
    %1322 = vdwg.mxu0
    %v1331 = vunpack.c.l.b16 %v1265
    %v1332 = vunpack.c.l.b16 %v1266
    %v1333 = vunpack.c.l.b16 %v1267
    %v1334 = vunpack.c.l.b16 %v1268
    %v1335 = vunpack.c.l.b16 %v1269
    %v1336 = vunpack.c.l.b16 %v1270
    %v1337 = vunpack.c.l.b16 %v1271
    %v1338 = vunpack.c.l.b16 %v1272
    %v1339 = vpack.c.b16 %v1332, %v1331
    %v1340 = vpack.c.b16 %v1334, %v1333
    %v1341 = vpack.c.b16 %v1336, %v1335
    %v1342 = vpack.c.b16 %v1338, %v1337
    %v1348 = vsel %vm241, %v1264, 0
    %1350 = vmatpush.bf16.msra.mxu0 0
    %1351 = vmatpush.bf16.msra.mxu0 0
    %1352 = vmatpush.bf16.msra.mxu0 0
    %1353 = vmatpush.bf16.msra.mxu0 0
    %1354 = vmatpush.bf16.msra.mxu0 %v1342
    %1355 = vmatpush.bf16.msra.mxu0 %v1341
    %1356 = vmatpush.bf16.msra.mxu0 %v1340
    %1357 = vmatpush.bf16.msra.mxu0 %v1339
    %1358 = vmatmul.bf16.gmra.mxu0 %v1348
    %v1359 = vpop.f32.mrf.mxu0
    %v1360 = vadd.f32 %v1320, %v1359
    %v1361 = vpop.f32.mrf.mxu0
    %1362 = vdwg.mxu0
    %v1363 = vld [vmem:[#allocation20] sm:$0x1]
    %v1365 = vperm.slane %v1363, 0
    %v1367 = vadd.f32 %v1360, %v1365
    %vm1368 = vcmp.gt.f32.partialorder %v1367, 0.0
    %v1369 = vmul.f32 %v1367, 0.2
    %v1370 = vsel %vm1368, %v1367, %v1369
    %vm1371 = vcmask 254976
    %1372 = vst.msk [vmem:[#allocation22] sm:$0x3] %vm1371, %v1370
    // Predicated region
    $region134: #{tpu_custom_call.1} parent=1 // pred_check
      _
    $region135: #{tpu_custom_call.1} parent=1 // pred_check_branch
      %1374 = sbr.rel (0) target = $region137
    $region136: #{tpu_custom_call.1} parent=1 // pred_region
      %1376 = vsyncadd [#allocation4], 0
      %s1378 = sshll.u32 [#allocation22], 4
      %s1379 = int_to_ptr.vmem [resolvable:$true] %s1378
      %s1380 = sshll.u32 %s21, 4
      %s1381 = int_to_ptr.hbm [resolvable:$true] %s1380
      %1383 = dma.vmem_to_hbm [thread:$0]  %s1379, 32, %s1381, [#allocation4]
    $region137: #{tpu_custom_call.1} parent=1 // pred_fallthru
      _
    // Predicated region
    $region138: #{tpu_custom_call.1} parent=1 // pred_check
      _
    $region139: #{tpu_custom_call.1} parent=1 // pred_check_branch
      %1385 = sbr.rel (0) target = $region141
    $region140: #{tpu_custom_call.1} parent=1 // pred_region
      %1387 = dma.done [#allocation4], 32
    $region141: #{tpu_custom_call.1} parent=1 // pred_fallthru
      _
    %1388 = vsyncpa [#allocation3], 1
    %1389 = vsyncpa [#allocation6], 1
    %1390 = vsyncpa [#allocation9], 1
    %1391 = vsyncpa [#allocation12], 1
    %1392 = vsyncpa [#allocation15], 1
    %1393 = vsyncpa [#allocation18], 1
    %1394 = vsyncpa [#allocation21], 1
    %1395 = vsyncpa [#allocation4], 1

</llo_original>
